<compile_context>
chip_gen: v7x
topology: tpu7x:2x2x1
jax: 0.10.0
libtpu: 0.0.40
codegen_flags: <defaults>
</compile_context>

<pallas_src>
import functools

import jax
import jax.numpy as jnp
from jax.experimental import pallas as pl
from jax.experimental.pallas import tpu as pltpu

# ----------------------------- config (small) -------------------------------
B = 2          # batch
S = 8          # max_seq_len
H = 32         # bert hidden_size
NH = 4         # attention heads
HD = H // NH   # head dim
E = 32         # trigger_distance embedding_dims (module default 256, small here)
M = 128        # mid_linear_dims
VOCAB = 100
MAX_POS = 64
N_DIST = 512
EPS = 1e-12    # bert layer_norm_eps
OUT_PAD = 128  # lane-dense classifier width; real logits are columns 0..3


# ----------------------------- Pallas head kernel ---------------------------
def head_kernel(dist_idx_ref,                  # SMEM (B, S) int32 (scalar prefetch)
                x_ref,                         # VMEM (S, H) f32: bert rows of batch b
                w_ref, b_ref,                  # VMEM (B, H) f32: per-batch CLN scale/shift
                dist_tbl_ref,                  # HBM  (N_DIST, E) f32
                lnw_a_ref, lnw_b_ref, lnb_a_ref, lnb_b_ref,
                wm_a_ref, wm_b_ref, bm_ref, wc_ref, bc_ref,
                out_ref,                       # VMEM (S, OUT_PAD) bf16
                dist_buf, dma_sems,            # scratch: VMEM (S, E) f32, DMA sems (S,)
                *, eps):
    bidx = pl.program_id(0)
    x = x_ref[...]                             # (S, H) f32
    s_rows, hidden = x.shape

    # ---- in-kernel gather of trigger-distance embedding rows (HBM -> VMEM) ----
    # Overlapped with the ConditionalLayerNorm compute below.
    # TODO(synk): at real S (512) switch to pl.loop with a double-buffered
    # row-block gather instead of a static unroll.
    copies = []
    for r in range(s_rows):
        idx = dist_idx_ref[bidx, r]
        cp = pltpu.make_async_copy(dist_tbl_ref.at[pl.ds(idx, 1)],
                                   dist_buf.at[pl.ds(r, 1)],
                                   dma_sems.at[r])
        cp.start()
        copies.append(cp)

    # ---- per-batch CLN scale/shift (conditioned in the wrapper, f32) ----
    w_vec = w_ref[pl.ds(bidx, 1), :]           # (1, H), broadcast over S rows
    b_vec = b_ref[pl.ds(bidx, 1), :]           # (1, H)

    # ---- ConditionalLayerNorm over H (rsqrt -> EUP slot) ----
    mean = jnp.mean(x, axis=-1, keepdims=True)
    xc = x - mean
    var = jnp.mean(xc * xc, axis=-1, keepdims=True)
    y = xc * jax.lax.rsqrt(var + eps) * w_vec + b_vec          # (S, H)

    for cp in copies:
        cp.wait()
    dist = dist_buf[...]                                       # (S, E) f32

    # ---- LayerNorm over the virtual concat([y, dist], -1), width D = H+E ----
    d_total = hidden + dist.shape[-1]
    mu = (jnp.sum(y, axis=-1, keepdims=True)
          + jnp.sum(dist, axis=-1, keepdims=True)) / d_total
    ya = y - mu
    da = dist - mu
    v = (jnp.sum(ya * ya, axis=-1, keepdims=True)
         + jnp.sum(da * da, axis=-1, keepdims=True)) / d_total
    inv = jax.lax.rsqrt(v + eps)
    za = ya * inv * lnw_a_ref[...] + lnb_a_ref[...]            # (S, H)
    zb = da * inv * lnw_b_ref[...] + lnb_b_ref[...]            # (S, E)

    # ---- mid_linear (Linear + ReLU; dropout is identity in eval) ----
    # bf16 MXU operands, f32 accumulation; wm pre-split in the wrapper.
    mid = (jnp.dot(za.astype(jnp.bfloat16), wm_a_ref[...],
                   preferred_element_type=jnp.float32)
           + jnp.dot(zb.astype(jnp.bfloat16), wm_b_ref[...],
                     preferred_element_type=jnp.float32)
           + bm_ref[...])
    mid = jnp.maximum(mid, 0.0)                                # (S, M) f32

    # ---- padded [obj | sub | zeros] classifier + sigmoid; lane-dense bf16 store ----
    logits = jax.nn.sigmoid(
        jnp.dot(mid.astype(jnp.bfloat16), wc_ref[...],
                preferred_element_type=jnp.float32) + bc_ref[...])   # (S, 128)
    out_ref[...] = logits.astype(out_ref.dtype)


def sub_obj_head(seq_out, trig_feat, dist_table, trigger_distance, p, m_pad_to=None):
    """seq_out: (B,S,H) f32; trig_feat: (B,2H) f32; dist_table: (N_DIST,E) f32;
    trigger_distance: (B,S) int32."""
    b, s, h = seq_out.shape
    e = dist_table.shape[-1]

    # Per-batch conditioning on B rows, in f32 (removes the S-times redundant
    # conditioning dot + HBM stream; separate wd/bd dots -> no lane-internal split).
    w_vec_all = (trig_feat @ p["wd"] + p["cln_g"]).astype(jnp.float32)   # (B, H)
    b_vec_all = (trig_feat @ p["bd"] + p["cln_b"]).astype(jnp.float32)   # (B, H)

    lnw_a, lnw_b = p["ln_w"][:, :h], p["ln_w"][:, h:]
    lnb_a, lnb_b = p["ln_b"][:, :h], p["ln_b"][:, h:]

    wm, bm, wc, bc = p["wm"], p["bm"], p["wc"], p["bc"]
    m = wm.shape[-1]
    if m_pad_to is not None and m_pad_to > m:
        # Fill the 256-wide MXU on v6e/v7x by zero-padding the mid width (exact
        # no-op through ReLU and the classifier).  Leave M=128 on v5e.
        wm = jnp.zeros((wm.shape[0], m_pad_to), wm.dtype).at[:, :m].set(wm)
        bm = jnp.zeros((1, m_pad_to), bm.dtype).at[:, :m].set(bm)
        wc = jnp.zeros((m_pad_to, wc.shape[-1]), wc.dtype).at[:m, :].set(wc)
        m = m_pad_to
    wm_a = wm[:h].astype(jnp.bfloat16)                                   # (H, M)
    wm_b = wm[h:].astype(jnp.bfloat16)                                   # (E, M)
    n_cls = wc.shape[-1]
    wc_pad = jnp.zeros((m, OUT_PAD), jnp.float32).at[:, :n_cls].set(wc) \
                .astype(jnp.bfloat16)                                    # (M, 128)
    bc_pad = jnp.zeros((1, OUT_PAD), jnp.float32).at[:, :n_cls].set(bc)  # (1, 128)

    # Grid over batch = S-row tiles; "parallel" lets v7x split batches across
    # its two TensorCores.  Weights/conditioning tables use constant index_maps
    # so they stay resident (no re-DMA across steps); the distance table stays
    # in HBM and is gathered in-kernel.
    # TODO(synk): at real dims raise pipeline depth on the streamed x block
    # (pipeline_mode=pl.Buffered(3)) for v5e and bump vmem_limit_bytes.
    out = pl.pallas_call(
        functools.partial(head_kernel, eps=EPS),
        grid_spec=pltpu.PrefetchScalarGridSpec(
            num_scalar_prefetch=1,
            grid=(b,),
            in_specs=[
                pl.BlockSpec((None, s, h), lambda i, d: (i, 0, 0)),   # x rows of batch i
                pl.BlockSpec((b, h), lambda i, d: (0, 0)),            # CLN scale, resident
                pl.BlockSpec((b, h), lambda i, d: (0, 0)),            # CLN shift, resident
                pl.BlockSpec(memory_space=pl.ANY),                    # distance table in HBM
                pl.BlockSpec((1, h), lambda i, d: (0, 0)),            # ln_w[:H]
                pl.BlockSpec((1, e), lambda i, d: (0, 0)),            # ln_w[H:]
                pl.BlockSpec((1, h), lambda i, d: (0, 0)),            # ln_b[:H]
                pl.BlockSpec((1, e), lambda i, d: (0, 0)),            # ln_b[H:]
                pl.BlockSpec((h, m), lambda i, d: (0, 0)),            # wm_a
                pl.BlockSpec((e, m), lambda i, d: (0, 0)),            # wm_b
                pl.BlockSpec((1, m), lambda i, d: (0, 0)),            # bm
                pl.BlockSpec((m, OUT_PAD), lambda i, d: (0, 0)),      # wc (padded)
                pl.BlockSpec((1, OUT_PAD), lambda i, d: (0, 0)),      # bc (padded)
            ],
            out_specs=pl.BlockSpec((None, s, OUT_PAD), lambda i, d: (i, 0, 0)),
            scratch_shapes=[pltpu.VMEM((s, e), jnp.float32),
                            pltpu.SemaphoreType.DMA((s,))],
        ),
        out_shape=jax.ShapeDtypeStruct((b, s, OUT_PAD), jnp.bfloat16),
        compiler_params=pltpu.CompilerParams(
            dimension_semantics=("parallel",),
            vmem_limit_bytes=32 * 1024 * 1024),
    )(trigger_distance.astype(jnp.int32), seq_out, w_vec_all, b_vec_all,
      dist_table, lnw_a, lnw_b, lnb_a, lnb_b, wm_a, wm_b, bm, wc_pad, bc_pad)

    return out[..., :4].astype(jnp.float32)                              # (B, S, 4)


# ----------------------------- plain-JAX glue --------------------------------
def _layer_norm(x, w, b, eps=EPS):
    mu = x.mean(-1, keepdims=True)
    xc = x - mu
    var = (xc * xc).mean(-1, keepdims=True)
    return xc / jnp.sqrt(var + eps) * w + b


def tiny_bert_forward(p, token_ids, attention_mask, token_type_ids):
    """Synthetic deterministic 1-layer BERT encoder (replaces from_pretrained)."""
    bsz, seq = token_ids.shape
    pos = jnp.arange(seq)[None, :]
    h = p["word"][token_ids] + p["pos"][pos] + p["type"][token_type_ids]
    h = _layer_norm(h, p["eln_w"], p["eln_b"])

    q = h @ p["wq"] + p["bq"]
    k = h @ p["wk"] + p["bk"]
    v = h @ p["wv"] + p["bv"]
    split = lambda t: t.reshape(bsz, seq, NH, HD).transpose(0, 2, 1, 3)
    qh, kh, vh = split(q), split(k), split(v)
    scores = jnp.einsum("bhqd,bhkd->bhqk", qh, kh) / jnp.sqrt(jnp.float32(HD))
    scores = scores + (1.0 - attention_mask[:, None, None, :].astype(jnp.float32)) * -10000.0
    probs = jax.nn.softmax(scores, axis=-1)
    ctx = jnp.einsum("bhqk,bhkd->bhqd", probs, vh).transpose(0, 2, 1, 3).reshape(bsz, seq, H)
    h = _layer_norm(h + (ctx @ p["wo"] + p["bo"]), p["ln1_w"], p["ln1_b"])

    inter = jax.nn.gelu(h @ p["wi"] + p["bi"])
    h = _layer_norm(h + (inter @ p["wf"] + p["bf"]), p["ln2_w"], p["ln2_b"])

    pooled = jnp.tanh(h[:, 0] @ p["wp"] + p["bp"])
    return h, pooled


def batch_gather(data, index):
    # data: (B, S, H), index: (B, n) -> (B, n, H)   (== torch.gather along dim 1)
    idx = jnp.broadcast_to(index[:, :, None], index.shape + (data.shape[-1],))
    return jnp.take_along_axis(data, idx, axis=1)


def bert_sub_obj_forward(bert_p, head_p, dist_emb_table,
                         token_ids, attention_masks, token_type_ids,
                         trigger_index, trigger_distance):
    seq_out, _pooled = tiny_bert_forward(bert_p, token_ids, attention_masks, token_type_ids)
    trig_feat = batch_gather(seq_out, trigger_index).reshape(seq_out.shape[0], -1)  # (B, 2H)
    logits = sub_obj_head(seq_out, trig_feat, dist_emb_table, trigger_distance, head_p)
    return logits


# pure-JAX reference of the head (for a numerical sanity check)
def head_reference(seq_out, trig_feat, dist_feat, p):
    w = trig_feat[:, None, :] @ p["wd"] + p["cln_g"]          # (B,1,H)
    b = trig_feat[:, None, :] @ p["bd"] + p["cln_b"]
    mu = seq_out.mean(-1, keepdims=True)
    xc = seq_out - mu
    var = (xc * xc).mean(-1, keepdims=True)
    y = xc / jnp.sqrt(var + EPS) * w + b
    z = jnp.concatenate([y, dist_feat], axis=-1)
    z = _layer_norm(z, p["ln_w"][0], p["ln_b"][0])
    mid = jnp.maximum(z @ p["wm"] + p["bm"][0], 0.0)
    return jax.nn.sigmoid(mid @ p["wc"] + p["bc"][0])


# ----------------------------- param init ------------------------------------
def init_params(key):
    ks = jax.random.split(key, 32)
    n = lambda i, shape, s=0.02: (s * jax.random.normal(ks[i], shape)).astype(jnp.float32)
    zeros = lambda shape: jnp.zeros(shape, jnp.float32)
    ones = lambda shape: jnp.ones(shape, jnp.float32)

    bert_p = dict(
        word=n(0, (VOCAB, H)), pos=n(1, (MAX_POS, H)), type=n(2, (2, H)),
        eln_w=ones((H,)), eln_b=zeros((H,)),
        wq=n(3, (H, H)), bq=zeros((H,)), wk=n(4, (H, H)), bk=zeros((H,)),
        wv=n(5, (H, H)), bv=zeros((H,)), wo=n(6, (H, H)), bo=zeros((H,)),
        ln1_w=ones((H,)), ln1_b=zeros((H,)),
        wi=n(7, (H, 4 * H)), bi=zeros((4 * H,)),
        wf=n(8, (4 * H, H)), bf=zeros((H,)),
        ln2_w=ones((H,)), ln2_b=zeros((H,)),
        wp=n(9, (H, H)), bp=zeros((H,)),
    )

    D = H + E
    # ConditionalLayerNorm: module init zeros weight_dense/bias_dense; use small
    # nonzero deterministic values here so the conditioning path is exercised.
    head_p = dict(
        cln_g=ones((1, H)), cln_b=zeros((1, H)),
        wd=n(10, (2 * H, H)), bd=n(11, (2 * H, H)),
        ln_w=ones((1, D)), ln_b=zeros((1, D)),
        wm=n(12, (D, M)), bm=zeros((1, M)),          # nn.Linear bias zeroed by _init_weights
        wc=n(13, (M, 4)), bc=zeros((1, 4)),          # [obj_classifier | sub_classifier]
    )
    dist_emb_table = n(14, (N_DIST, E))              # trigger_distance_embedding, std=0.02
    return bert_p, head_p, dist_emb_table


# ----------------------------- main -------------------------------------------
if __name__ == "__main__":
    key = jax.random.PRNGKey(0)
    kp, k1, k2, k3, k4, k5 = jax.random.split(key, 6)

    bert_p, head_p, dist_emb_table = init_params(kp)

    token_ids = jax.random.randint(k1, (B, S), 0, VOCAB, dtype=jnp.int32)
    attention_masks = jnp.ones((B, S), dtype=jnp.int32)
    token_type_ids = jnp.zeros((B, S), dtype=jnp.int32)
    trigger_index = jax.random.randint(k3, (B, 2), 0, S, dtype=jnp.int32)
    trigger_distance = jax.random.randint(k4, (B, S), 0, N_DIST, dtype=jnp.int32)

    logits = bert_sub_obj_forward(bert_p, head_p, dist_emb_table,
                                  token_ids, attention_masks, token_type_ids,
                                  trigger_index, trigger_distance)
    logits = jax.block_until_ready(logits)

    # sanity check vs pure-JAX f32 reference of the head (kernel uses bf16 MXU
    # operands / bf16 output with f32 accumulation, hence the relaxed tolerance).
    seq_out, _ = tiny_bert_forward(bert_p, token_ids, attention_masks, token_type_ids)
    trig_feat = batch_gather(seq_out, trigger_index).reshape(B, -1)
    dist_feat = dist_emb_table[trigger_distance]
    ref = head_reference(seq_out, trig_feat, dist_feat, head_p)
    assert logits.shape == (B, S, 4)
    assert jnp.allclose(logits, ref, rtol=1e-2, atol=1e-2)

    print("KERNEL_OK")
</pallas_src>

<mosaic_0001>
module attributes {stable_mosaic.version = 11 : i64} {
  func.func @head_kernel(%arg0: i32, %arg1: memref<2x8xi32, #tpu.memory_space<smem>>, %arg2: memref<1x8x32xf32, #tpu.memory_space<vmem>>, %arg3: memref<2x32xf32, #tpu.memory_space<vmem>>, %arg4: memref<2x32xf32, #tpu.memory_space<vmem>>, %arg5: memref<512x32xf32, #tpu.memory_space<any>>, %arg6: memref<1x32xf32, #tpu.memory_space<vmem>>, %arg7: memref<1x32xf32, #tpu.memory_space<vmem>>, %arg8: memref<1x32xf32, #tpu.memory_space<vmem>>, %arg9: memref<1x32xf32, #tpu.memory_space<vmem>>, %arg10: memref<32x128xbf16, #tpu.memory_space<vmem>>, %arg11: memref<32x128xbf16, #tpu.memory_space<vmem>>, %arg12: memref<1x128xf32, #tpu.memory_space<vmem>>, %arg13: memref<128x128xbf16, #tpu.memory_space<vmem>>, %arg14: memref<1x128xf32, #tpu.memory_space<vmem>>, %arg15: memref<1x8x128xbf16, #tpu.memory_space<vmem>>, %arg16: memref<8x32xf32, #tpu.memory_space<vmem>>, %arg17: memref<8x!tpu.dma_semaphore, #tpu.memory_space<semaphore_mem>>) attributes {dimension_semantics = [#tpu.dimension_semantics<parallel>], iteration_bounds = array<i64: 2>, scalar_prefetch = 1 : i64, scratch_operands = 2 : i64, tpu.core_type = #tpu.core_type<tc>, window_params = [{transform_indices = @transform_0, window_bounds = array<i64: 1, 8, 32>}, {pipeline_mode = #tpu.pipeline_mode<synchronous>, transform_indices = @transform_1, window_bounds = array<i64: 2, 32>}, {pipeline_mode = #tpu.pipeline_mode<synchronous>, transform_indices = @transform_2, window_bounds = array<i64: 2, 32>}, {}, {pipeline_mode = #tpu.pipeline_mode<synchronous>, transform_indices = @transform_4, window_bounds = array<i64: 1, 32>}, {pipeline_mode = #tpu.pipeline_mode<synchronous>, transform_indices = @transform_5, window_bounds = array<i64: 1, 32>}, {pipeline_mode = #tpu.pipeline_mode<synchronous>, transform_indices = @transform_6, window_bounds = array<i64: 1, 32>}, {pipeline_mode = #tpu.pipeline_mode<synchronous>, transform_indices = @transform_7, window_bounds = array<i64: 1, 32>}, {pipeline_mode = #tpu.pipeline_mode<synchronous>, transform_indices = @transform_8, window_bounds = array<i64: 32, 128>}, {pipeline_mode = #tpu.pipeline_mode<synchronous>, transform_indices = @transform_9, window_bounds = array<i64: 32, 128>}, {pipeline_mode = #tpu.pipeline_mode<synchronous>, transform_indices = @transform_10, window_bounds = array<i64: 1, 128>}, {pipeline_mode = #tpu.pipeline_mode<synchronous>, transform_indices = @transform_11, window_bounds = array<i64: 128, 128>}, {pipeline_mode = #tpu.pipeline_mode<synchronous>, transform_indices = @transform_12, window_bounds = array<i64: 1, 128>}, {transform_indices = @transform_13, window_bounds = array<i64: 1, 8, 128>}]} {
    %c0 = arith.constant 0 : index
    %c0_0 = arith.constant 0 : index
    %c0_1 = arith.constant 0 : index
    %0 = vector.load %arg2[%c0, %c0_0, %c0_1] : memref<1x8x32xf32, #tpu.memory_space<vmem>>, vector<1x8x32xf32>
    %1 = vector.shape_cast %0 : vector<1x8x32xf32> to vector<8x32xf32>
    %2 = arith.index_cast %arg0 : i32 to index
    %c0_2 = arith.constant 0 : index
    %3 = memref.load %arg1[%2, %c0_2] : memref<2x8xi32, #tpu.memory_space<smem>>
    %c0_i32 = arith.constant 0 : i32
    %c0_i32_3 = arith.constant 0 : i32
    %4 = tpu.memref_slice %arg5[%3, %c0_i32_3] : memref<512x32xf32, #tpu.memory_space<any>> -> memref<1x32xf32, #tpu.memory_space<any>>
    %c0_i32_4 = arith.constant 0 : i32
    %c0_i32_5 = arith.constant 0 : i32
    %5 = tpu.memref_slice %arg16[%c0_i32_4, %c0_i32_5] : memref<8x32xf32, #tpu.memory_space<vmem>> -> memref<1x32xf32, #tpu.memory_space<vmem>>
    %6 = tpu.memref_slice %arg17[%c0_i32] : memref<8x!tpu.dma_semaphore, #tpu.memory_space<semaphore_mem>> -> memref<1x!tpu.dma_semaphore, #tpu.memory_space<semaphore_mem>>
    %7 = tpu.memref_squeeze %6 : memref<1x!tpu.dma_semaphore, #tpu.memory_space<semaphore_mem>> -> memref<!tpu.dma_semaphore, #tpu.memory_space<semaphore_mem>>
    tpu.enqueue_dma source(%4 : memref<1x32xf32, #tpu.memory_space<any>>) target(%5 : memref<1x32xf32, #tpu.memory_space<vmem>>) target_semaphore(%7 : memref<!tpu.dma_semaphore, #tpu.memory_space<semaphore_mem>>)
    %8 = arith.index_cast %arg0 : i32 to index
    %c1 = arith.constant 1 : index
    %9 = memref.load %arg1[%8, %c1] : memref<2x8xi32, #tpu.memory_space<smem>>
    %c1_i32 = arith.constant 1 : i32
    %c0_i32_6 = arith.constant 0 : i32
    %10 = tpu.memref_slice %arg5[%9, %c0_i32_6] : memref<512x32xf32, #tpu.memory_space<any>> -> memref<1x32xf32, #tpu.memory_space<any>>
    %c1_i32_7 = arith.constant 1 : i32
    %c0_i32_8 = arith.constant 0 : i32
    %11 = tpu.memref_slice %arg16[%c1_i32_7, %c0_i32_8] : memref<8x32xf32, #tpu.memory_space<vmem>> -> memref<1x32xf32, #tpu.memory_space<vmem>>
    %12 = tpu.memref_slice %arg17[%c1_i32] : memref<8x!tpu.dma_semaphore, #tpu.memory_space<semaphore_mem>> -> memref<1x!tpu.dma_semaphore, #tpu.memory_space<semaphore_mem>>
    %13 = tpu.memref_squeeze %12 : memref<1x!tpu.dma_semaphore, #tpu.memory_space<semaphore_mem>> -> memref<!tpu.dma_semaphore, #tpu.memory_space<semaphore_mem>>
    tpu.enqueue_dma source(%10 : memref<1x32xf32, #tpu.memory_space<any>>) target(%11 : memref<1x32xf32, #tpu.memory_space<vmem>>) target_semaphore(%13 : memref<!tpu.dma_semaphore, #tpu.memory_space<semaphore_mem>>)
    %14 = arith.index_cast %arg0 : i32 to index
    %c2 = arith.constant 2 : index
    %15 = memref.load %arg1[%14, %c2] : memref<2x8xi32, #tpu.memory_space<smem>>
    %c2_i32 = arith.constant 2 : i32
    %c0_i32_9 = arith.constant 0 : i32
    %16 = tpu.memref_slice %arg5[%15, %c0_i32_9] : memref<512x32xf32, #tpu.memory_space<any>> -> memref<1x32xf32, #tpu.memory_space<any>>
    %c2_i32_10 = arith.constant 2 : i32
    %c0_i32_11 = arith.constant 0 : i32
    %17 = tpu.memref_slice %arg16[%c2_i32_10, %c0_i32_11] : memref<8x32xf32, #tpu.memory_space<vmem>> -> memref<1x32xf32, #tpu.memory_space<vmem>>
    %18 = tpu.memref_slice %arg17[%c2_i32] : memref<8x!tpu.dma_semaphore, #tpu.memory_space<semaphore_mem>> -> memref<1x!tpu.dma_semaphore, #tpu.memory_space<semaphore_mem>>
    %19 = tpu.memref_squeeze %18 : memref<1x!tpu.dma_semaphore, #tpu.memory_space<semaphore_mem>> -> memref<!tpu.dma_semaphore, #tpu.memory_space<semaphore_mem>>
    tpu.enqueue_dma source(%16 : memref<1x32xf32, #tpu.memory_space<any>>) target(%17 : memref<1x32xf32, #tpu.memory_space<vmem>>) target_semaphore(%19 : memref<!tpu.dma_semaphore, #tpu.memory_space<semaphore_mem>>)
    %20 = arith.index_cast %arg0 : i32 to index
    %c3 = arith.constant 3 : index
    %21 = memref.load %arg1[%20, %c3] : memref<2x8xi32, #tpu.memory_space<smem>>
    %c3_i32 = arith.constant 3 : i32
    %c0_i32_12 = arith.constant 0 : i32
    %22 = tpu.memref_slice %arg5[%21, %c0_i32_12] : memref<512x32xf32, #tpu.memory_space<any>> -> memref<1x32xf32, #tpu.memory_space<any>>
    %c3_i32_13 = arith.constant 3 : i32
    %c0_i32_14 = arith.constant 0 : i32
    %23 = tpu.memref_slice %arg16[%c3_i32_13, %c0_i32_14] : memref<8x32xf32, #tpu.memory_space<vmem>> -> memref<1x32xf32, #tpu.memory_space<vmem>>
    %24 = tpu.memref_slice %arg17[%c3_i32] : memref<8x!tpu.dma_semaphore, #tpu.memory_space<semaphore_mem>> -> memref<1x!tpu.dma_semaphore, #tpu.memory_space<semaphore_mem>>
    %25 = tpu.memref_squeeze %24 : memref<1x!tpu.dma_semaphore, #tpu.memory_space<semaphore_mem>> -> memref<!tpu.dma_semaphore, #tpu.memory_space<semaphore_mem>>
    tpu.enqueue_dma source(%22 : memref<1x32xf32, #tpu.memory_space<any>>) target(%23 : memref<1x32xf32, #tpu.memory_space<vmem>>) target_semaphore(%25 : memref<!tpu.dma_semaphore, #tpu.memory_space<semaphore_mem>>)
    %26 = arith.index_cast %arg0 : i32 to index
    %c4 = arith.constant 4 : index
    %27 = memref.load %arg1[%26, %c4] : memref<2x8xi32, #tpu.memory_space<smem>>
    %c4_i32 = arith.constant 4 : i32
    %c0_i32_15 = arith.constant 0 : i32
    %28 = tpu.memref_slice %arg5[%27, %c0_i32_15] : memref<512x32xf32, #tpu.memory_space<any>> -> memref<1x32xf32, #tpu.memory_space<any>>
    %c4_i32_16 = arith.constant 4 : i32
    %c0_i32_17 = arith.constant 0 : i32
    %29 = tpu.memref_slice %arg16[%c4_i32_16, %c0_i32_17] : memref<8x32xf32, #tpu.memory_space<vmem>> -> memref<1x32xf32, #tpu.memory_space<vmem>>
    %30 = tpu.memref_slice %arg17[%c4_i32] : memref<8x!tpu.dma_semaphore, #tpu.memory_space<semaphore_mem>> -> memref<1x!tpu.dma_semaphore, #tpu.memory_space<semaphore_mem>>
    %31 = tpu.memref_squeeze %30 : memref<1x!tpu.dma_semaphore, #tpu.memory_space<semaphore_mem>> -> memref<!tpu.dma_semaphore, #tpu.memory_space<semaphore_mem>>
    tpu.enqueue_dma source(%28 : memref<1x32xf32, #tpu.memory_space<any>>) target(%29 : memref<1x32xf32, #tpu.memory_space<vmem>>) target_semaphore(%31 : memref<!tpu.dma_semaphore, #tpu.memory_space<semaphore_mem>>)
    %32 = arith.index_cast %arg0 : i32 to index
    %c5 = arith.constant 5 : index
    %33 = memref.load %arg1[%32, %c5] : memref<2x8xi32, #tpu.memory_space<smem>>
    %c5_i32 = arith.constant 5 : i32
    %c0_i32_18 = arith.constant 0 : i32
    %34 = tpu.memref_slice %arg5[%33, %c0_i32_18] : memref<512x32xf32, #tpu.memory_space<any>> -> memref<1x32xf32, #tpu.memory_space<any>>
    %c5_i32_19 = arith.constant 5 : i32
    %c0_i32_20 = arith.constant 0 : i32
    %35 = tpu.memref_slice %arg16[%c5_i32_19, %c0_i32_20] : memref<8x32xf32, #tpu.memory_space<vmem>> -> memref<1x32xf32, #tpu.memory_space<vmem>>
    %36 = tpu.memref_slice %arg17[%c5_i32] : memref<8x!tpu.dma_semaphore, #tpu.memory_space<semaphore_mem>> -> memref<1x!tpu.dma_semaphore, #tpu.memory_space<semaphore_mem>>
    %37 = tpu.memref_squeeze %36 : memref<1x!tpu.dma_semaphore, #tpu.memory_space<semaphore_mem>> -> memref<!tpu.dma_semaphore, #tpu.memory_space<semaphore_mem>>
    tpu.enqueue_dma source(%34 : memref<1x32xf32, #tpu.memory_space<any>>) target(%35 : memref<1x32xf32, #tpu.memory_space<vmem>>) target_semaphore(%37 : memref<!tpu.dma_semaphore, #tpu.memory_space<semaphore_mem>>)
    %38 = arith.index_cast %arg0 : i32 to index
    %c6 = arith.constant 6 : index
    %39 = memref.load %arg1[%38, %c6] : memref<2x8xi32, #tpu.memory_space<smem>>
    %c6_i32 = arith.constant 6 : i32
    %c0_i32_21 = arith.constant 0 : i32
    %40 = tpu.memref_slice %arg5[%39, %c0_i32_21] : memref<512x32xf32, #tpu.memory_space<any>> -> memref<1x32xf32, #tpu.memory_space<any>>
    %c6_i32_22 = arith.constant 6 : i32
    %c0_i32_23 = arith.constant 0 : i32
    %41 = tpu.memref_slice %arg16[%c6_i32_22, %c0_i32_23] : memref<8x32xf32, #tpu.memory_space<vmem>> -> memref<1x32xf32, #tpu.memory_space<vmem>>
    %42 = tpu.memref_slice %arg17[%c6_i32] : memref<8x!tpu.dma_semaphore, #tpu.memory_space<semaphore_mem>> -> memref<1x!tpu.dma_semaphore, #tpu.memory_space<semaphore_mem>>
    %43 = tpu.memref_squeeze %42 : memref<1x!tpu.dma_semaphore, #tpu.memory_space<semaphore_mem>> -> memref<!tpu.dma_semaphore, #tpu.memory_space<semaphore_mem>>
    tpu.enqueue_dma source(%40 : memref<1x32xf32, #tpu.memory_space<any>>) target(%41 : memref<1x32xf32, #tpu.memory_space<vmem>>) target_semaphore(%43 : memref<!tpu.dma_semaphore, #tpu.memory_space<semaphore_mem>>)
    %44 = arith.index_cast %arg0 : i32 to index
    %c7 = arith.constant 7 : index
    %45 = memref.load %arg1[%44, %c7] : memref<2x8xi32, #tpu.memory_space<smem>>
    %c7_i32 = arith.constant 7 : i32
    %c0_i32_24 = arith.constant 0 : i32
    %46 = tpu.memref_slice %arg5[%45, %c0_i32_24] : memref<512x32xf32, #tpu.memory_space<any>> -> memref<1x32xf32, #tpu.memory_space<any>>
    %c7_i32_25 = arith.constant 7 : i32
    %c0_i32_26 = arith.constant 0 : i32
    %47 = tpu.memref_slice %arg16[%c7_i32_25, %c0_i32_26] : memref<8x32xf32, #tpu.memory_space<vmem>> -> memref<1x32xf32, #tpu.memory_space<vmem>>
    %48 = tpu.memref_slice %arg17[%c7_i32] : memref<8x!tpu.dma_semaphore, #tpu.memory_space<semaphore_mem>> -> memref<1x!tpu.dma_semaphore, #tpu.memory_space<semaphore_mem>>
    %49 = tpu.memref_squeeze %48 : memref<1x!tpu.dma_semaphore, #tpu.memory_space<semaphore_mem>> -> memref<!tpu.dma_semaphore, #tpu.memory_space<semaphore_mem>>
    tpu.enqueue_dma source(%46 : memref<1x32xf32, #tpu.memory_space<any>>) target(%47 : memref<1x32xf32, #tpu.memory_space<vmem>>) target_semaphore(%49 : memref<!tpu.dma_semaphore, #tpu.memory_space<semaphore_mem>>)
    %50 = arith.index_cast %arg0 : i32 to index
    %c0_27 = arith.constant 0 : index
    %51 = vector.load %arg3[%50, %c0_27] : memref<2x32xf32, #tpu.memory_space<vmem>>, vector<1x32xf32>
    %52 = arith.index_cast %arg0 : i32 to index
    %c0_28 = arith.constant 0 : index
    %53 = vector.load %arg4[%52, %c0_28] : memref<2x32xf32, #tpu.memory_space<vmem>>, vector<1x32xf32>
    %cst = arith.constant dense<0.000000e+00> : vector<8xf32>
    %54 = vector.multi_reduction <add>, %1, %cst [1] : vector<8x32xf32> to vector<8xf32>
    %55 = vector.shape_cast %54 : vector<8xf32> to vector<8x1xf32>
    %cst_29 = arith.constant 3.200000e+01 : f32
    %56 = vector.broadcast %cst_29 : f32 to vector<8x1xf32>
    %57 = arith.divf %55, %56 : vector<8x1xf32>
    %58 = vector.broadcast %57 : vector<8x1xf32> to vector<8x32xf32>
    %59 = arith.subf %1, %58 : vector<8x32xf32>
    %60 = arith.mulf %59, %59 : vector<8x32xf32>
    %cst_30 = arith.constant dense<0.000000e+00> : vector<8xf32>
    %61 = vector.multi_reduction <add>, %60, %cst_30 [1] : vector<8x32xf32> to vector<8xf32>
    %62 = vector.shape_cast %61 : vector<8xf32> to vector<8x1xf32>
    %cst_31 = arith.constant 3.200000e+01 : f32
    %63 = vector.broadcast %cst_31 : f32 to vector<8x1xf32>
    %64 = arith.divf %62, %63 : vector<8x1xf32>
    %cst_32 = arith.constant 9.99999996E-13 : f32
    %65 = vector.broadcast %cst_32 : f32 to vector<8x1xf32>
    %66 = arith.addf %64, %65 : vector<8x1xf32>
    %67 = math.rsqrt %66 : vector<8x1xf32>
    %68 = vector.broadcast %67 : vector<8x1xf32> to vector<8x32xf32>
    %69 = arith.mulf %59, %68 : vector<8x32xf32>
    %70 = vector.broadcast %51 : vector<1x32xf32> to vector<8x32xf32>
    %71 = arith.mulf %69, %70 : vector<8x32xf32>
    %72 = vector.broadcast %53 : vector<1x32xf32> to vector<8x32xf32>
    %73 = arith.addf %71, %72 : vector<8x32xf32>
    %c0_i32_33 = arith.constant 0 : i32
    %c0_i32_34 = arith.constant 0 : i32
    %74 = tpu.memref_slice %arg5[%3, %c0_i32_34] : memref<512x32xf32, #tpu.memory_space<any>> -> memref<1x32xf32, #tpu.memory_space<any>>
    %c0_i32_35 = arith.constant 0 : i32
    %c0_i32_36 = arith.constant 0 : i32
    %75 = tpu.memref_slice %arg16[%c0_i32_35, %c0_i32_36] : memref<8x32xf32, #tpu.memory_space<vmem>> -> memref<1x32xf32, #tpu.memory_space<vmem>>
    %76 = tpu.memref_slice %arg17[%c0_i32_33] : memref<8x!tpu.dma_semaphore, #tpu.memory_space<semaphore_mem>> -> memref<1x!tpu.dma_semaphore, #tpu.memory_space<semaphore_mem>>
    %77 = tpu.memref_squeeze %76 : memref<1x!tpu.dma_semaphore, #tpu.memory_space<semaphore_mem>> -> memref<!tpu.dma_semaphore, #tpu.memory_space<semaphore_mem>>
    tpu.wait_dma2 semaphore(%77 : memref<!tpu.dma_semaphore, #tpu.memory_space<semaphore_mem>>) src(%74 : memref<1x32xf32, #tpu.memory_space<any>>) dst(%75 : memref<1x32xf32, #tpu.memory_space<vmem>>)
    %c1_i32_37 = arith.constant 1 : i32
    %c0_i32_38 = arith.constant 0 : i32
    %78 = tpu.memref_slice %arg5[%9, %c0_i32_38] : memref<512x32xf32, #tpu.memory_space<any>> -> memref<1x32xf32, #tpu.memory_space<any>>
    %c1_i32_39 = arith.constant 1 : i32
    %c0_i32_40 = arith.constant 0 : i32
    %79 = tpu.memref_slice %arg16[%c1_i32_39, %c0_i32_40] : memref<8x32xf32, #tpu.memory_space<vmem>> -> memref<1x32xf32, #tpu.memory_space<vmem>>
    %80 = tpu.memref_slice %arg17[%c1_i32_37] : memref<8x!tpu.dma_semaphore, #tpu.memory_space<semaphore_mem>> -> memref<1x!tpu.dma_semaphore, #tpu.memory_space<semaphore_mem>>
    %81 = tpu.memref_squeeze %80 : memref<1x!tpu.dma_semaphore, #tpu.memory_space<semaphore_mem>> -> memref<!tpu.dma_semaphore, #tpu.memory_space<semaphore_mem>>
    tpu.wait_dma2 semaphore(%81 : memref<!tpu.dma_semaphore, #tpu.memory_space<semaphore_mem>>) src(%78 : memref<1x32xf32, #tpu.memory_space<any>>) dst(%79 : memref<1x32xf32, #tpu.memory_space<vmem>>)
    %c2_i32_41 = arith.constant 2 : i32
    %c0_i32_42 = arith.constant 0 : i32
    %82 = tpu.memref_slice %arg5[%15, %c0_i32_42] : memref<512x32xf32, #tpu.memory_space<any>> -> memref<1x32xf32, #tpu.memory_space<any>>
    %c2_i32_43 = arith.constant 2 : i32
    %c0_i32_44 = arith.constant 0 : i32
    %83 = tpu.memref_slice %arg16[%c2_i32_43, %c0_i32_44] : memref<8x32xf32, #tpu.memory_space<vmem>> -> memref<1x32xf32, #tpu.memory_space<vmem>>
    %84 = tpu.memref_slice %arg17[%c2_i32_41] : memref<8x!tpu.dma_semaphore, #tpu.memory_space<semaphore_mem>> -> memref<1x!tpu.dma_semaphore, #tpu.memory_space<semaphore_mem>>
    %85 = tpu.memref_squeeze %84 : memref<1x!tpu.dma_semaphore, #tpu.memory_space<semaphore_mem>> -> memref<!tpu.dma_semaphore, #tpu.memory_space<semaphore_mem>>
    tpu.wait_dma2 semaphore(%85 : memref<!tpu.dma_semaphore, #tpu.memory_space<semaphore_mem>>) src(%82 : memref<1x32xf32, #tpu.memory_space<any>>) dst(%83 : memref<1x32xf32, #tpu.memory_space<vmem>>)
    %c3_i32_45 = arith.constant 3 : i32
    %c0_i32_46 = arith.constant 0 : i32
    %86 = tpu.memref_slice %arg5[%21, %c0_i32_46] : memref<512x32xf32, #tpu.memory_space<any>> -> memref<1x32xf32, #tpu.memory_space<any>>
    %c3_i32_47 = arith.constant 3 : i32
    %c0_i32_48 = arith.constant 0 : i32
    %87 = tpu.memref_slice %arg16[%c3_i32_47, %c0_i32_48] : memref<8x32xf32, #tpu.memory_space<vmem>> -> memref<1x32xf32, #tpu.memory_space<vmem>>
    %88 = tpu.memref_slice %arg17[%c3_i32_45] : memref<8x!tpu.dma_semaphore, #tpu.memory_space<semaphore_mem>> -> memref<1x!tpu.dma_semaphore, #tpu.memory_space<semaphore_mem>>
    %89 = tpu.memref_squeeze %88 : memref<1x!tpu.dma_semaphore, #tpu.memory_space<semaphore_mem>> -> memref<!tpu.dma_semaphore, #tpu.memory_space<semaphore_mem>>
    tpu.wait_dma2 semaphore(%89 : memref<!tpu.dma_semaphore, #tpu.memory_space<semaphore_mem>>) src(%86 : memref<1x32xf32, #tpu.memory_space<any>>) dst(%87 : memref<1x32xf32, #tpu.memory_space<vmem>>)
    %c4_i32_49 = arith.constant 4 : i32
    %c0_i32_50 = arith.constant 0 : i32
    %90 = tpu.memref_slice %arg5[%27, %c0_i32_50] : memref<512x32xf32, #tpu.memory_space<any>> -> memref<1x32xf32, #tpu.memory_space<any>>
    %c4_i32_51 = arith.constant 4 : i32
    %c0_i32_52 = arith.constant 0 : i32
    %91 = tpu.memref_slice %arg16[%c4_i32_51, %c0_i32_52] : memref<8x32xf32, #tpu.memory_space<vmem>> -> memref<1x32xf32, #tpu.memory_space<vmem>>
    %92 = tpu.memref_slice %arg17[%c4_i32_49] : memref<8x!tpu.dma_semaphore, #tpu.memory_space<semaphore_mem>> -> memref<1x!tpu.dma_semaphore, #tpu.memory_space<semaphore_mem>>
    %93 = tpu.memref_squeeze %92 : memref<1x!tpu.dma_semaphore, #tpu.memory_space<semaphore_mem>> -> memref<!tpu.dma_semaphore, #tpu.memory_space<semaphore_mem>>
    tpu.wait_dma2 semaphore(%93 : memref<!tpu.dma_semaphore, #tpu.memory_space<semaphore_mem>>) src(%90 : memref<1x32xf32, #tpu.memory_space<any>>) dst(%91 : memref<1x32xf32, #tpu.memory_space<vmem>>)
    %c5_i32_53 = arith.constant 5 : i32
    %c0_i32_54 = arith.constant 0 : i32
    %94 = tpu.memref_slice %arg5[%33, %c0_i32_54] : memref<512x32xf32, #tpu.memory_space<any>> -> memref<1x32xf32, #tpu.memory_space<any>>
    %c5_i32_55 = arith.constant 5 : i32
    %c0_i32_56 = arith.constant 0 : i32
    %95 = tpu.memref_slice %arg16[%c5_i32_55, %c0_i32_56] : memref<8x32xf32, #tpu.memory_space<vmem>> -> memref<1x32xf32, #tpu.memory_space<vmem>>
    %96 = tpu.memref_slice %arg17[%c5_i32_53] : memref<8x!tpu.dma_semaphore, #tpu.memory_space<semaphore_mem>> -> memref<1x!tpu.dma_semaphore, #tpu.memory_space<semaphore_mem>>
    %97 = tpu.memref_squeeze %96 : memref<1x!tpu.dma_semaphore, #tpu.memory_space<semaphore_mem>> -> memref<!tpu.dma_semaphore, #tpu.memory_space<semaphore_mem>>
    tpu.wait_dma2 semaphore(%97 : memref<!tpu.dma_semaphore, #tpu.memory_space<semaphore_mem>>) src(%94 : memref<1x32xf32, #tpu.memory_space<any>>) dst(%95 : memref<1x32xf32, #tpu.memory_space<vmem>>)
    %c6_i32_57 = arith.constant 6 : i32
    %c0_i32_58 = arith.constant 0 : i32
    %98 = tpu.memref_slice %arg5[%39, %c0_i32_58] : memref<512x32xf32, #tpu.memory_space<any>> -> memref<1x32xf32, #tpu.memory_space<any>>
    %c6_i32_59 = arith.constant 6 : i32
    %c0_i32_60 = arith.constant 0 : i32
    %99 = tpu.memref_slice %arg16[%c6_i32_59, %c0_i32_60] : memref<8x32xf32, #tpu.memory_space<vmem>> -> memref<1x32xf32, #tpu.memory_space<vmem>>
    %100 = tpu.memref_slice %arg17[%c6_i32_57] : memref<8x!tpu.dma_semaphore, #tpu.memory_space<semaphore_mem>> -> memref<1x!tpu.dma_semaphore, #tpu.memory_space<semaphore_mem>>
    %101 = tpu.memref_squeeze %100 : memref<1x!tpu.dma_semaphore, #tpu.memory_space<semaphore_mem>> -> memref<!tpu.dma_semaphore, #tpu.memory_space<semaphore_mem>>
    tpu.wait_dma2 semaphore(%101 : memref<!tpu.dma_semaphore, #tpu.memory_space<semaphore_mem>>) src(%98 : memref<1x32xf32, #tpu.memory_space<any>>) dst(%99 : memref<1x32xf32, #tpu.memory_space<vmem>>)
    %c7_i32_61 = arith.constant 7 : i32
    %c0_i32_62 = arith.constant 0 : i32
    %102 = tpu.memref_slice %arg5[%45, %c0_i32_62] : memref<512x32xf32, #tpu.memory_space<any>> -> memref<1x32xf32, #tpu.memory_space<any>>
    %c7_i32_63 = arith.constant 7 : i32
    %c0_i32_64 = arith.constant 0 : i32
    %103 = tpu.memref_slice %arg16[%c7_i32_63, %c0_i32_64] : memref<8x32xf32, #tpu.memory_space<vmem>> -> memref<1x32xf32, #tpu.memory_space<vmem>>
    %104 = tpu.memref_slice %arg17[%c7_i32_61] : memref<8x!tpu.dma_semaphore, #tpu.memory_space<semaphore_mem>> -> memref<1x!tpu.dma_semaphore, #tpu.memory_space<semaphore_mem>>
    %105 = tpu.memref_squeeze %104 : memref<1x!tpu.dma_semaphore, #tpu.memory_space<semaphore_mem>> -> memref<!tpu.dma_semaphore, #tpu.memory_space<semaphore_mem>>
    tpu.wait_dma2 semaphore(%105 : memref<!tpu.dma_semaphore, #tpu.memory_space<semaphore_mem>>) src(%102 : memref<1x32xf32, #tpu.memory_space<any>>) dst(%103 : memref<1x32xf32, #tpu.memory_space<vmem>>)
    %c0_65 = arith.constant 0 : index
    %c0_66 = arith.constant 0 : index
    %106 = vector.load %arg16[%c0_65, %c0_66] : memref<8x32xf32, #tpu.memory_space<vmem>>, vector<8x32xf32>
    %cst_67 = arith.constant dense<0.000000e+00> : vector<8xf32>
    %107 = vector.multi_reduction <add>, %73, %cst_67 [1] : vector<8x32xf32> to vector<8xf32>
    %108 = vector.shape_cast %107 : vector<8xf32> to vector<8x1xf32>
    %cst_68 = arith.constant dense<0.000000e+00> : vector<8xf32>
    %109 = vector.multi_reduction <add>, %106, %cst_68 [1] : vector<8x32xf32> to vector<8xf32>
    %110 = vector.shape_cast %109 : vector<8xf32> to vector<8x1xf32>
    %111 = arith.addf %108, %110 : vector<8x1xf32>
    %cst_69 = arith.constant 6.400000e+01 : f32
    %112 = vector.broadcast %cst_69 : f32 to vector<8x1xf32>
    %113 = arith.divf %111, %112 : vector<8x1xf32>
    %114 = vector.broadcast %113 : vector<8x1xf32> to vector<8x32xf32>
    %115 = arith.subf %73, %114 : vector<8x32xf32>
    %116 = vector.broadcast %113 : vector<8x1xf32> to vector<8x32xf32>
    %117 = arith.subf %106, %116 : vector<8x32xf32>
    %118 = arith.mulf %115, %115 : vector<8x32xf32>
    %cst_70 = arith.constant dense<0.000000e+00> : vector<8xf32>
    %119 = vector.multi_reduction <add>, %118, %cst_70 [1] : vector<8x32xf32> to vector<8xf32>
    %120 = vector.shape_cast %119 : vector<8xf32> to vector<8x1xf32>
    %121 = arith.mulf %117, %117 : vector<8x32xf32>
    %cst_71 = arith.constant dense<0.000000e+00> : vector<8xf32>
    %122 = vector.multi_reduction <add>, %121, %cst_71 [1] : vector<8x32xf32> to vector<8xf32>
    %123 = vector.shape_cast %122 : vector<8xf32> to vector<8x1xf32>
    %124 = arith.addf %120, %123 : vector<8x1xf32>
    %cst_72 = arith.constant 6.400000e+01 : f32
    %125 = vector.broadcast %cst_72 : f32 to vector<8x1xf32>
    %126 = arith.divf %124, %125 : vector<8x1xf32>
    %cst_73 = arith.constant 9.99999996E-13 : f32
    %127 = vector.broadcast %cst_73 : f32 to vector<8x1xf32>
    %128 = arith.addf %126, %127 : vector<8x1xf32>
    %129 = math.rsqrt %128 : vector<8x1xf32>
    %130 = vector.broadcast %129 : vector<8x1xf32> to vector<8x32xf32>
    %131 = arith.mulf %115, %130 : vector<8x32xf32>
    %c0_74 = arith.constant 0 : index
    %c0_75 = arith.constant 0 : index
    %132 = vector.load %arg6[%c0_74, %c0_75] : memref<1x32xf32, #tpu.memory_space<vmem>>, vector<1x32xf32>
    %133 = vector.broadcast %132 : vector<1x32xf32> to vector<8x32xf32>
    %134 = arith.mulf %131, %133 : vector<8x32xf32>
    %c0_76 = arith.constant 0 : index
    %c0_77 = arith.constant 0 : index
    %135 = vector.load %arg8[%c0_76, %c0_77] : memref<1x32xf32, #tpu.memory_space<vmem>>, vector<1x32xf32>
    %136 = vector.broadcast %135 : vector<1x32xf32> to vector<8x32xf32>
    %137 = arith.addf %134, %136 : vector<8x32xf32>
    %138 = vector.broadcast %129 : vector<8x1xf32> to vector<8x32xf32>
    %139 = arith.mulf %117, %138 : vector<8x32xf32>
    %c0_78 = arith.constant 0 : index
    %c0_79 = arith.constant 0 : index
    %140 = vector.load %arg7[%c0_78, %c0_79] : memref<1x32xf32, #tpu.memory_space<vmem>>, vector<1x32xf32>
    %141 = vector.broadcast %140 : vector<1x32xf32> to vector<8x32xf32>
    %142 = arith.mulf %139, %141 : vector<8x32xf32>
    %c0_80 = arith.constant 0 : index
    %c0_81 = arith.constant 0 : index
    %143 = vector.load %arg9[%c0_80, %c0_81] : memref<1x32xf32, #tpu.memory_space<vmem>>, vector<1x32xf32>
    %144 = vector.broadcast %143 : vector<1x32xf32> to vector<8x32xf32>
    %145 = arith.addf %142, %144 : vector<8x32xf32>
    %146 = arith.truncf %137 : vector<8x32xf32> to vector<8x32xbf16>
    %c0_82 = arith.constant 0 : index
    %c0_83 = arith.constant 0 : index
    %147 = vector.load %arg10[%c0_82, %c0_83] : memref<32x128xbf16, #tpu.memory_space<vmem>>, vector<32x128xbf16>
    %cst_84 = arith.constant dense<0.000000e+00> : vector<8x128xf32>
    %148 = tpu.matmul %146, %147, %cst_84 {dimension_numbers = #tpu.dot_dimension_numbers<[1], [0], [0], [1], [0, 0, 1, 1], [], []>} : vector<8x32xbf16>, vector<32x128xbf16>, vector<8x128xf32> -> vector<8x128xf32>
    %149 = arith.truncf %145 : vector<8x32xf32> to vector<8x32xbf16>
    %c0_85 = arith.constant 0 : index
    %c0_86 = arith.constant 0 : index
    %150 = vector.load %arg11[%c0_85, %c0_86] : memref<32x128xbf16, #tpu.memory_space<vmem>>, vector<32x128xbf16>
    %cst_87 = arith.constant dense<0.000000e+00> : vector<8x128xf32>
    %151 = tpu.matmul %149, %150, %cst_87 {dimension_numbers = #tpu.dot_dimension_numbers<[1], [0], [0], [1], [0, 0, 1, 1], [], []>} : vector<8x32xbf16>, vector<32x128xbf16>, vector<8x128xf32> -> vector<8x128xf32>
    %152 = arith.addf %148, %151 : vector<8x128xf32>
    %c0_88 = arith.constant 0 : index
    %c0_89 = arith.constant 0 : index
    %153 = vector.load %arg12[%c0_88, %c0_89] : memref<1x128xf32, #tpu.memory_space<vmem>>, vector<1x128xf32>
    %154 = vector.broadcast %153 : vector<1x128xf32> to vector<8x128xf32>
    %155 = arith.addf %152, %154 : vector<8x128xf32>
    %cst_90 = arith.constant 0.000000e+00 : f32
    %156 = vector.broadcast %cst_90 : f32 to vector<8x128xf32>
    %157 = arith.maximumf %155, %156 : vector<8x128xf32>
    %158 = arith.truncf %157 : vector<8x128xf32> to vector<8x128xbf16>
    %c0_91 = arith.constant 0 : index
    %c0_92 = arith.constant 0 : index
    %159 = vector.load %arg13[%c0_91, %c0_92] : memref<128x128xbf16, #tpu.memory_space<vmem>>, vector<128x128xbf16>
    %cst_93 = arith.constant dense<0.000000e+00> : vector<8x128xf32>
    %160 = tpu.matmul %158, %159, %cst_93 {dimension_numbers = #tpu.dot_dimension_numbers<[1], [0], [0], [1], [0, 0, 1, 1], [], []>} : vector<8x128xbf16>, vector<128x128xbf16>, vector<8x128xf32> -> vector<8x128xf32>
    %c0_94 = arith.constant 0 : index
    %c0_95 = arith.constant 0 : index
    %161 = vector.load %arg14[%c0_94, %c0_95] : memref<1x128xf32, #tpu.memory_space<vmem>>, vector<1x128xf32>
    %162 = vector.broadcast %161 : vector<1x128xf32> to vector<8x128xf32>
    %163 = arith.addf %160, %162 : vector<8x128xf32>
    %164 = arith.negf %163 : vector<8x128xf32>
    %165 = math.exp %164 : vector<8x128xf32>
    %cst_96 = arith.constant 1.000000e+00 : f32
    %166 = vector.broadcast %cst_96 : f32 to vector<8x128xf32>
    %167 = arith.addf %166, %165 : vector<8x128xf32>
    %168 = arith.divf %166, %167 : vector<8x128xf32>
    %169 = arith.truncf %168 : vector<8x128xf32> to vector<8x128xbf16>
    %c0_97 = arith.constant 0 : index
    %c0_98 = arith.constant 0 : index
    %c0_99 = arith.constant 0 : index
    %170 = vector.load %arg15[%c0_97, %c0_98, %c0_99] : memref<1x8x128xbf16, #tpu.memory_space<vmem>>, vector<1x8x128xbf16>
    %171 = vector.shape_cast %170 : vector<1x8x128xbf16> to vector<8x128xbf16>
    %172 = vector.shape_cast %169 : vector<8x128xbf16> to vector<1x8x128xbf16>
    tpu.vector_store %arg15[%c0_97, %c0_98, %c0_99], %172 {strides = array<i32>} : memref<1x8x128xbf16, #tpu.memory_space<vmem>>, vector<1x8x128xbf16>,
    return
  }
  func.func @transform_0(%arg0: i32, %arg1: memref<2x8xi32, #tpu.memory_space<smem>>) -> (i32, i32, i32) {
    %c0_i32 = arith.constant 0 : i32
    %c0_i32_0 = arith.constant 0 : i32
    %c0_i32_1 = arith.constant 0 : i32
    return %arg0, %c0_i32, %c0_i32_0 : i32, i32, i32
  }
  func.func @transform_1(%arg0: i32, %arg1: memref<2x8xi32, #tpu.memory_space<smem>>) -> (i32, i32) {
    %c0_i32 = arith.constant 0 : i32
    %c0_i32_0 = arith.constant 0 : i32
    %c0_i32_1 = arith.constant 0 : i32
    return %c0_i32, %c0_i32_0 : i32, i32
  }
  func.func @transform_2(%arg0: i32, %arg1: memref<2x8xi32, #tpu.memory_space<smem>>) -> (i32, i32) {
    %c0_i32 = arith.constant 0 : i32
    %c0_i32_0 = arith.constant 0 : i32
    %c0_i32_1 = arith.constant 0 : i32
    return %c0_i32, %c0_i32_0 : i32, i32
  }
  func.func @transform_4(%arg0: i32, %arg1: memref<2x8xi32, #tpu.memory_space<smem>>) -> (i32, i32) {
    %c0_i32 = arith.constant 0 : i32
    %c0_i32_0 = arith.constant 0 : i32
    %c0_i32_1 = arith.constant 0 : i32
    return %c0_i32, %c0_i32_0 : i32, i32
  }
  func.func @transform_5(%arg0: i32, %arg1: memref<2x8xi32, #tpu.memory_space<smem>>) -> (i32, i32) {
    %c0_i32 = arith.constant 0 : i32
    %c0_i32_0 = arith.constant 0 : i32
    %c0_i32_1 = arith.constant 0 : i32
    return %c0_i32, %c0_i32_0 : i32, i32
  }
  func.func @transform_6(%arg0: i32, %arg1: memref<2x8xi32, #tpu.memory_space<smem>>) -> (i32, i32) {
    %c0_i32 = arith.constant 0 : i32
    %c0_i32_0 = arith.constant 0 : i32
    %c0_i32_1 = arith.constant 0 : i32
    return %c0_i32, %c0_i32_0 : i32, i32
  }
  func.func @transform_7(%arg0: i32, %arg1: memref<2x8xi32, #tpu.memory_space<smem>>) -> (i32, i32) {
    %c0_i32 = arith.constant 0 : i32
    %c0_i32_0 = arith.constant 0 : i32
    %c0_i32_1 = arith.constant 0 : i32
    return %c0_i32, %c0_i32_0 : i32, i32
  }
  func.func @transform_8(%arg0: i32, %arg1: memref<2x8xi32, #tpu.memory_space<smem>>) -> (i32, i32) {
    %c0_i32 = arith.constant 0 : i32
    %c0_i32_0 = arith.constant 0 : i32
    %c0_i32_1 = arith.constant 0 : i32
    return %c0_i32, %c0_i32_0 : i32, i32
  }
  func.func @transform_9(%arg0: i32, %arg1: memref<2x8xi32, #tpu.memory_space<smem>>) -> (i32, i32) {
    %c0_i32 = arith.constant 0 : i32
    %c0_i32_0 = arith.constant 0 : i32
    %c0_i32_1 = arith.constant 0 : i32
    return %c0_i32, %c0_i32_0 : i32, i32
  }
  func.func @transform_10(%arg0: i32, %arg1: memref<2x8xi32, #tpu.memory_space<smem>>) -> (i32, i32) {
    %c0_i32 = arith.constant 0 : i32
    %c0_i32_0 = arith.constant 0 : i32
    %c0_i32_1 = arith.constant 0 : i32
    return %c0_i32, %c0_i32_0 : i32, i32
  }
  func.func @transform_11(%arg0: i32, %arg1: memref<2x8xi32, #tpu.memory_space<smem>>) -> (i32, i32) {
    %c0_i32 = arith.constant 0 : i32
    %c0_i32_0 = arith.constant 0 : i32
    %c0_i32_1 = arith.constant 0 : i32
    return %c0_i32, %c0_i32_0 : i32, i32
  }
  func.func @transform_12(%arg0: i32, %arg1: memref<2x8xi32, #tpu.memory_space<smem>>) -> (i32, i32) {
    %c0_i32 = arith.constant 0 : i32
    %c0_i32_0 = arith.constant 0 : i32
    %c0_i32_1 = arith.constant 0 : i32
    return %c0_i32, %c0_i32_0 : i32, i32
  }
  func.func @transform_13(%arg0: i32, %arg1: memref<2x8xi32, #tpu.memory_space<smem>>) -> (i32, i32, i32) {
    %c0_i32 = arith.constant 0 : i32
    %c0_i32_0 = arith.constant 0 : i32
    %c0_i32_1 = arith.constant 0 : i32
    return %arg0, %c0_i32, %c0_i32_0 : i32, i32, i32
  }
}

</mosaic_0001>

<llo_original>
// kernel: tpu_custom_call.1
$region0: #{tpu_custom_call.1}
  #allocation0 [shape = 'u32[]', space=smem, size = 0x4, offset = 0x4, fixed_abs, tag = 'smem constant byte address 0x4 - core index']
  #allocation1 [shape = 'u32[144,128]{1,0:T(1,128)}', space=vmem, size = 0x12000, scoped, tag = 'internal scratch']
  #allocation2 [shape = 'f32[8,32]{1,0:T(8,128)}', space=vmem, size = 0x1000, scoped, tag = 'scratch operand']
  #allocation3 [shape = 's32[8]{0}', space=sflag, size = 0x20, scoped, tag = 'scratch operand']
  #allocation4 [shape = 's32[1]{0}', space=sflag, size = 0x4, scoped, tag = 'scoped memory for tpu_custom_call.1']
  #allocation5 [shape = 'u8[1024]{0}', space=smem, size = 0x400, scoped, tag = 'prefetched SMEM operand 0']
  #allocation8 [shape = 's32[]', space=sflag, size = 0x4, offset = 0, fixed_abs, tag = 'sflag constant byte address 0x0 - dummy sync flag']
  #allocation9 [shape = 's32[]', space=sflag, size = 0x4, offset = 0, fixed_abs, tag = 'sflag constant byte address 0x0 - dummy sync flag']
  #allocation10 [shape = 's32[]', space=sflag, size = 0x4, offset = 0, fixed_abs, tag = 'sflag constant byte address 0x0 - dummy sync flag']
  #allocation11 [shape = 's32[]', space=sflag, size = 0x4, offset = 0, fixed_abs, tag = 'sflag constant byte address 0x0 - dummy sync flag']
  #allocation12 [shape = 's32[]', space=sflag, size = 0x4, offset = 0, fixed_abs, tag = 'sflag constant byte address 0x0 - dummy sync flag']
  #allocation13 [shape = 's32[]', space=sflag, size = 0x4, offset = 0, fixed_abs, tag = 'sflag constant byte address 0x0 - dummy sync flag']
  #allocation14 [shape = 's32[]', space=sflag, size = 0x4, offset = 0, fixed_abs, tag = 'sflag constant byte address 0x0 - dummy sync flag']
  #allocation15 [shape = 's32[]', space=sflag, size = 0x4, offset = 0, fixed_abs, tag = 'sflag constant byte address 0x0 - dummy sync flag']
  %s0 = inlined_call_operand.vmem [shape: s32[2,8], index: 0, kind: input, shape index: {}]
  %s1 = inlined_call_operand.vmem [shape: f32[2,8,32], index: 1, kind: input, shape index: {}]
  %s2 = inlined_call_operand.vmem [shape: f32[2,32], index: 2, kind: input, shape index: {}]
  %s3 = inlined_call_operand.vmem [shape: f32[2,32], index: 3, kind: input, shape index: {}]
  %s4 = inlined_call_operand.vmem [shape: f32[512,32], index: 4, kind: input, shape index: {}]
  %s5 = inlined_call_operand.vmem [shape: f32[1,32], index: 5, kind: input, shape index: {}]
  %s6 = inlined_call_operand.vmem [shape: f32[1,32], index: 6, kind: input, shape index: {}]
  %s7 = inlined_call_operand.vmem [shape: f32[1,32], index: 7, kind: input, shape index: {}]
  %s8 = inlined_call_operand.vmem [shape: f32[1,32], index: 8, kind: input, shape index: {}]
  %s9 = inlined_call_operand.vmem [shape: bf16[32,128], index: 9, kind: input, shape index: {}]
  %s10 = inlined_call_operand.vmem [shape: bf16[32,128], index: 10, kind: input, shape index: {}]
  %s11 = inlined_call_operand.vmem [shape: f32[1,128], index: 11, kind: input, shape index: {}]
  %s12 = inlined_call_operand.vmem [shape: bf16[128,128], index: 12, kind: input, shape index: {}]
  %s13 = inlined_call_operand.vmem [shape: f32[1,128], index: 13, kind: input, shape index: {}]
  %s14 = inlined_call_operand.hbm [shape: bf16[2,8,128], index: 14, kind: output, shape index: {}]
  %s15 = sld [smem:[#allocation0]]
  $region321: #{tpu_custom_call.1} parent=0
    _
  %s17 = ssub.s32 1, %s15
  %s18 = scalar_select 0, %s17, %s15
  %s19 = sshll.u32 %s0, 4
  %s20 = int_to_ptr.vmem [resolvable:$true] %s19
  %22 = dma.vmem_to_smem %s20, 32, [#allocation5], [#allocation4]
  %23 = dma.done [#allocation4], 32
  %24 = sfence
  $region1: #{tpu_custom_call.1} parent=0
    #allocation6 [shape = 'u8[4096]{0}', space=vmem, size = 0x1000, scoped, tag = 'output window, operand 0']
    #allocation7 [shape = 's32[2]{0}', space=sflag, size = 0x8, scoped, tag = 'scoped memory for tpu_custom_call.1']
    %25 = vsyncpa [#allocation7], 0
    %s26 = scalar_lea.sflag [#allocation7], 1
    %27 = vsyncpa %s26, 0
    loop: start=0, step=1, limit=4
    $region2: #{tpu_custom_call.1} parent=1 // loop_pre_header
      _
    $region3: #{tpu_custom_call.1} parent=1 // loop_header
      %s29 = sphi 0, %s33
      %p30 = scmp.ge.s32.totalorder %s29, 4
      %s39 = sphi 0, %s41
      %s42 = sphi 0, %s39
      %s43 = sphi 0, %s42
      %s59 = sphi 0, %s43
      %s63 = sphi 0, %s63
      %s65 = sphi 0, %s63
      %s66 = sphi 0, %s65
      %s80 = sphi 0, %s66
      %s84 = sphi 0, %s84
      %s86 = sphi 0, %s84
      %s87 = sphi 0, %s86
      %s101 = sphi 0, %s87
      %s105 = sphi 0, %s105
      %s107 = sphi 0, %s105
      %s108 = sphi 0, %s107
      %s122 = sphi 0, %s108
      %s126 = sphi 0, %s126
      %s128 = sphi 0, %s126
      %s129 = sphi 0, %s128
      %s143 = sphi 0, %s129
      %s147 = sphi 0, %s147
      %s149 = sphi 0, %s147
      %s150 = sphi 0, %s149
      %s164 = sphi 0, %s150
      %s168 = sphi 0, %s168
      %s170 = sphi 0, %s168
      %s171 = sphi 0, %s170
      %s185 = sphi 0, %s171
      %s189 = sphi 0, %s189
      %s191 = sphi 0, %s189
      %s192 = sphi 0, %s191
      %s206 = sphi 0, %s192
      %s210 = sphi 0, %s210
      %s212 = sphi 0, %s210
      %s213 = sphi 0, %s212
      %s227 = sphi 0, %s213
      %s231 = sphi 0, %s231
      %s233 = sphi 0, %s231
      %s234 = sphi 0, %s233
      %s248 = sphi 0, %s234
      %s252 = sphi 0, %s252
      %s254 = sphi 0, %s252
      %s255 = sphi 0, %s254
      %s269 = sphi 0, %s255
      %s273 = sphi 0, %s273
      %s275 = sphi 0, %s273
      %s276 = sphi 0, %s275
      %s290 = sphi 0, %s276
      %s296 = sphi 0, %s298
      %s299 = sphi 0, %s296
      %s300 = sphi 0, %s299
      %s316 = sphi 0, %s300
    $region4: #{tpu_custom_call.1} parent=1 // loop_header_branch
      %32 = sbr.rel (%p30) target = $region8
    $region5: #{tpu_custom_call.1} parent=1 // loop_body
      %s34 = ssub.s32 %s29, 1
      %s35 = ssub.s32 %s29, 2
      %s36 = sadd.s32 %s29, 1
      %s37 = ssub.s32 %s29, %s36
      %p38 = scmp.eq.s32.totalorder %s37, 0
      %s40 = sadd.s32 %s39, 1
      %s41 = scalar_select %p38, %s39, %s40
      %p44 = pneg %p38
      %p45 = scmp.eq.s32.totalorder %s29, 1
      %p46 = por %p44, %p45
      %p47 = scmp.ne.s32.totalorder %s39, %s42
      %p48 = scmp.eq.s32.totalorder %s29, 0
      %p49 = por %p47, %p48
      %p50 = scmp.ne.s32.totalorder %s39, %s42
      %p51 = scmp.eq.s32.totalorder %s34, 1
      %p52 = por %p50, %p51
      %p53 = scmp.ne.s32.totalorder %s42, %s43
      %p54 = scmp.eq.s32.totalorder %s34, 0
      %p55 = por %p53, %p54
      %p56 = scmp.ne.s32.totalorder %s42, %s43
      %p57 = scmp.eq.s32.totalorder %s35, 1
      %p58 = por %p56, %p57
      %p60 = scmp.ne.s32.totalorder %s43, %s59
      %p61 = scmp.eq.s32.totalorder %s35, 0
      %p62 = por %p60, %p61
      %s64 = sadd.s32 %s63, 1
      %p67 = scmp.eq.s32.totalorder %s29, 1
      %p68 = scmp.ne.s32.totalorder %s63, %s65
      %p69 = scmp.eq.s32.totalorder %s29, 0
      %p70 = por %p68, %p69
      %p71 = scmp.ne.s32.totalorder %s63, %s65
      %p72 = scmp.eq.s32.totalorder %s34, 1
      %p73 = por %p71, %p72
      %p74 = scmp.ne.s32.totalorder %s65, %s66
      %p75 = scmp.eq.s32.totalorder %s34, 0
      %p76 = por %p74, %p75
      %p77 = scmp.ne.s32.totalorder %s65, %s66
      %p78 = scmp.eq.s32.totalorder %s35, 1
      %p79 = por %p77, %p78
      %p81 = scmp.ne.s32.totalorder %s66, %s80
      %p82 = scmp.eq.s32.totalorder %s35, 0
      %p83 = por %p81, %p82
      %s85 = sadd.s32 %s84, 1
      %p88 = scmp.eq.s32.totalorder %s29, 1
      %p89 = scmp.ne.s32.totalorder %s84, %s86
      %p90 = scmp.eq.s32.totalorder %s29, 0
      %p91 = por %p89, %p90
      %p92 = scmp.ne.s32.totalorder %s84, %s86
      %p93 = scmp.eq.s32.totalorder %s34, 1
      %p94 = por %p92, %p93
      %p95 = scmp.ne.s32.totalorder %s86, %s87
      %p96 = scmp.eq.s32.totalorder %s34, 0
      %p97 = por %p95, %p96
      %p98 = scmp.ne.s32.totalorder %s86, %s87
      %p99 = scmp.eq.s32.totalorder %s35, 1
      %p100 = por %p98, %p99
      %p102 = scmp.ne.s32.totalorder %s87, %s101
      %p103 = scmp.eq.s32.totalorder %s35, 0
      %p104 = por %p102, %p103
      %s106 = sadd.s32 %s105, 1
      %p109 = scmp.eq.s32.totalorder %s29, 1
      %p110 = scmp.ne.s32.totalorder %s105, %s107
      %p111 = scmp.eq.s32.totalorder %s29, 0
      %p112 = por %p110, %p111
      %p113 = scmp.ne.s32.totalorder %s105, %s107
      %p114 = scmp.eq.s32.totalorder %s34, 1
      %p115 = por %p113, %p114
      %p116 = scmp.ne.s32.totalorder %s107, %s108
      %p117 = scmp.eq.s32.totalorder %s34, 0
      %p118 = por %p116, %p117
      %p119 = scmp.ne.s32.totalorder %s107, %s108
      %p120 = scmp.eq.s32.totalorder %s35, 1
      %p121 = por %p119, %p120
      %p123 = scmp.ne.s32.totalorder %s108, %s122
      %p124 = scmp.eq.s32.totalorder %s35, 0
      %p125 = por %p123, %p124
      %s127 = sadd.s32 %s126, 1
      %p130 = scmp.eq.s32.totalorder %s29, 1
      %p131 = scmp.ne.s32.totalorder %s126, %s128
      %p132 = scmp.eq.s32.totalorder %s29, 0
      %p133 = por %p131, %p132
      %p134 = scmp.ne.s32.totalorder %s126, %s128
      %p135 = scmp.eq.s32.totalorder %s34, 1
      %p136 = por %p134, %p135
      %p137 = scmp.ne.s32.totalorder %s128, %s129
      %p138 = scmp.eq.s32.totalorder %s34, 0
      %p139 = por %p137, %p138
      %p140 = scmp.ne.s32.totalorder %s128, %s129
      %p141 = scmp.eq.s32.totalorder %s35, 1
      %p142 = por %p140, %p141
      %p144 = scmp.ne.s32.totalorder %s129, %s143
      %p145 = scmp.eq.s32.totalorder %s35, 0
      %p146 = por %p144, %p145
      %s148 = sadd.s32 %s147, 1
      %p151 = scmp.eq.s32.totalorder %s29, 1
      %p152 = scmp.ne.s32.totalorder %s147, %s149
      %p153 = scmp.eq.s32.totalorder %s29, 0
      %p154 = por %p152, %p153
      %p155 = scmp.ne.s32.totalorder %s147, %s149
      %p156 = scmp.eq.s32.totalorder %s34, 1
      %p157 = por %p155, %p156
      %p158 = scmp.ne.s32.totalorder %s149, %s150
      %p159 = scmp.eq.s32.totalorder %s34, 0
      %p160 = por %p158, %p159
      %p161 = scmp.ne.s32.totalorder %s149, %s150
      %p162 = scmp.eq.s32.totalorder %s35, 1
      %p163 = por %p161, %p162
      %p165 = scmp.ne.s32.totalorder %s150, %s164
      %p166 = scmp.eq.s32.totalorder %s35, 0
      %p167 = por %p165, %p166
      %s169 = sadd.s32 %s168, 1
      %p172 = scmp.eq.s32.totalorder %s29, 1
      %p173 = scmp.ne.s32.totalorder %s168, %s170
      %p174 = scmp.eq.s32.totalorder %s29, 0
      %p175 = por %p173, %p174
      %p176 = scmp.ne.s32.totalorder %s168, %s170
      %p177 = scmp.eq.s32.totalorder %s34, 1
      %p178 = por %p176, %p177
      %p179 = scmp.ne.s32.totalorder %s170, %s171
      %p180 = scmp.eq.s32.totalorder %s34, 0
      %p181 = por %p179, %p180
      %p182 = scmp.ne.s32.totalorder %s170, %s171
      %p183 = scmp.eq.s32.totalorder %s35, 1
      %p184 = por %p182, %p183
      %p186 = scmp.ne.s32.totalorder %s171, %s185
      %p187 = scmp.eq.s32.totalorder %s35, 0
      %p188 = por %p186, %p187
      %s190 = sadd.s32 %s189, 1
      %p193 = scmp.eq.s32.totalorder %s29, 1
      %p194 = scmp.ne.s32.totalorder %s189, %s191
      %p195 = scmp.eq.s32.totalorder %s29, 0
      %p196 = por %p194, %p195
      %p197 = scmp.ne.s32.totalorder %s189, %s191
      %p198 = scmp.eq.s32.totalorder %s34, 1
      %p199 = por %p197, %p198
      %p200 = scmp.ne.s32.totalorder %s191, %s192
      %p201 = scmp.eq.s32.totalorder %s34, 0
      %p202 = por %p200, %p201
      %p203 = scmp.ne.s32.totalorder %s191, %s192
      %p204 = scmp.eq.s32.totalorder %s35, 1
      %p205 = por %p203, %p204
      %p207 = scmp.ne.s32.totalorder %s192, %s206
      %p208 = scmp.eq.s32.totalorder %s35, 0
      %p209 = por %p207, %p208
      %s211 = sadd.s32 %s210, 1
      %p214 = scmp.eq.s32.totalorder %s29, 1
      %p215 = scmp.ne.s32.totalorder %s210, %s212
      %p216 = scmp.eq.s32.totalorder %s29, 0
      %p217 = por %p215, %p216
      %p218 = scmp.ne.s32.totalorder %s210, %s212
      %p219 = scmp.eq.s32.totalorder %s34, 1
      %p220 = por %p218, %p219
      %p221 = scmp.ne.s32.totalorder %s212, %s213
      %p222 = scmp.eq.s32.totalorder %s34, 0
      %p223 = por %p221, %p222
      %p224 = scmp.ne.s32.totalorder %s212, %s213
      %p225 = scmp.eq.s32.totalorder %s35, 1
      %p226 = por %p224, %p225
      %p228 = scmp.ne.s32.totalorder %s213, %s227
      %p229 = scmp.eq.s32.totalorder %s35, 0
      %p230 = por %p228, %p229
      %s232 = sadd.s32 %s231, 1
      %p235 = scmp.eq.s32.totalorder %s29, 1
      %p236 = scmp.ne.s32.totalorder %s231, %s233
      %p237 = scmp.eq.s32.totalorder %s29, 0
      %p238 = por %p236, %p237
      %p239 = scmp.ne.s32.totalorder %s231, %s233
      %p240 = scmp.eq.s32.totalorder %s34, 1
      %p241 = por %p239, %p240
      %p242 = scmp.ne.s32.totalorder %s233, %s234
      %p243 = scmp.eq.s32.totalorder %s34, 0
      %p244 = por %p242, %p243
      %p245 = scmp.ne.s32.totalorder %s233, %s234
      %p246 = scmp.eq.s32.totalorder %s35, 1
      %p247 = por %p245, %p246
      %p249 = scmp.ne.s32.totalorder %s234, %s248
      %p250 = scmp.eq.s32.totalorder %s35, 0
      %p251 = por %p249, %p250
      %s253 = sadd.s32 %s252, 1
      %p256 = scmp.eq.s32.totalorder %s29, 1
      %p257 = scmp.ne.s32.totalorder %s252, %s254
      %p258 = scmp.eq.s32.totalorder %s29, 0
      %p259 = por %p257, %p258
      %p260 = scmp.ne.s32.totalorder %s252, %s254
      %p261 = scmp.eq.s32.totalorder %s34, 1
      %p262 = por %p260, %p261
      %p263 = scmp.ne.s32.totalorder %s254, %s255
      %p264 = scmp.eq.s32.totalorder %s34, 0
      %p265 = por %p263, %p264
      %p266 = scmp.ne.s32.totalorder %s254, %s255
      %p267 = scmp.eq.s32.totalorder %s35, 1
      %p268 = por %p266, %p267
      %p270 = scmp.ne.s32.totalorder %s255, %s269
      %p271 = scmp.eq.s32.totalorder %s35, 0
      %p272 = por %p270, %p271
      %s274 = sadd.s32 %s273, 1
      %p277 = scmp.eq.s32.totalorder %s29, 1
      %p278 = scmp.ne.s32.totalorder %s273, %s275
      %p279 = scmp.eq.s32.totalorder %s29, 0
      %p280 = por %p278, %p279
      %p281 = scmp.ne.s32.totalorder %s273, %s275
      %p282 = scmp.eq.s32.totalorder %s34, 1
      %p283 = por %p281, %p282
      %p284 = scmp.ne.s32.totalorder %s275, %s276
      %p285 = scmp.eq.s32.totalorder %s34, 0
      %p286 = por %p284, %p285
      %p287 = scmp.ne.s32.totalorder %s275, %s276
      %p288 = scmp.eq.s32.totalorder %s35, 1
      %p289 = por %p287, %p288
      %p291 = scmp.ne.s32.totalorder %s276, %s290
      %p292 = scmp.eq.s32.totalorder %s35, 0
      %p293 = por %p291, %p292
      %s294 = ssub.s32 %s29, %s36
      %p295 = scmp.eq.s32.totalorder %s294, 0
      %s297 = sadd.s32 %s296, 1
      %s298 = scalar_select %p295, %s296, %s297
      %p301 = pneg %p295
      %p302 = scmp.eq.s32.totalorder %s29, 1
      %p303 = por %p301, %p302
      %p304 = scmp.ne.s32.totalorder %s296, %s299
      %p305 = scmp.eq.s32.totalorder %s29, 0
      %p306 = por %p304, %p305
      %p307 = scmp.ne.s32.totalorder %s296, %s299
      %p308 = scmp.eq.s32.totalorder %s34, 1
      %p309 = por %p307, %p308
      %p310 = scmp.ne.s32.totalorder %s299, %s300
      %p311 = scmp.eq.s32.totalorder %s34, 0
      %p312 = por %p310, %p311
      %p313 = scmp.ne.s32.totalorder %s299, %s300
      %p314 = scmp.eq.s32.totalorder %s35, 1
      %p315 = por %p313, %p314
      %p317 = scmp.ne.s32.totalorder %s300, %s316
      %p318 = scmp.eq.s32.totalorder %s35, 0
      %p319 = por %p317, %p318
      %p320 = scmp.le.s32.totalorder 1, %s29
      %p321 = scmp.lt.s32.totalorder %s29, 3
      %p322 = pnand %p320, %p321
      %p323 = pneg %p322
      // Predicated region
      $region9: #{tpu_custom_call.1} parent=5 // pred_check
        _
      $region10: #{tpu_custom_call.1} parent=5 // pred_check_branch
        %325 = sbr.rel (%p322) target = $region12
      $region11: #{tpu_custom_call.1} parent=5 // pred_region
        %s326 = ssub.s32 %s29, 1
        // Predicated region
        $region13: #{tpu_custom_call.1} parent=11 // pred_check
          %p327 = pneg %p76
        $region14: #{tpu_custom_call.1} parent=11 // pred_check_branch
          %329 = sbr.rel (%p327) target = $region16
        $region15: #{tpu_custom_call.1} parent=11 // pred_region
          _
        $region16: #{tpu_custom_call.1} parent=11 // pred_fallthru
          _
        // Predicated region
        $region17: #{tpu_custom_call.1} parent=11 // pred_check
          %p330 = pneg %p97
        $region18: #{tpu_custom_call.1} parent=11 // pred_check_branch
          %332 = sbr.rel (%p330) target = $region20
        $region19: #{tpu_custom_call.1} parent=11 // pred_region
          _
        $region20: #{tpu_custom_call.1} parent=11 // pred_fallthru
          _
        // Predicated region
        $region21: #{tpu_custom_call.1} parent=11 // pred_check
          %p333 = pneg %p118
        $region22: #{tpu_custom_call.1} parent=11 // pred_check_branch
          %335 = sbr.rel (%p333) target = $region24
        $region23: #{tpu_custom_call.1} parent=11 // pred_region
          _
        $region24: #{tpu_custom_call.1} parent=11 // pred_fallthru
          _
        // Predicated region
        $region25: #{tpu_custom_call.1} parent=11 // pred_check
          %p336 = pneg %p139
        $region26: #{tpu_custom_call.1} parent=11 // pred_check_branch
          %338 = sbr.rel (%p336) target = $region28
        $region27: #{tpu_custom_call.1} parent=11 // pred_region
          _
        $region28: #{tpu_custom_call.1} parent=11 // pred_fallthru
          _
        // Predicated region
        $region29: #{tpu_custom_call.1} parent=11 // pred_check
          %p339 = pneg %p160
        $region30: #{tpu_custom_call.1} parent=11 // pred_check_branch
          %341 = sbr.rel (%p339) target = $region32
        $region31: #{tpu_custom_call.1} parent=11 // pred_region
          _
        $region32: #{tpu_custom_call.1} parent=11 // pred_fallthru
          _
        // Predicated region
        $region33: #{tpu_custom_call.1} parent=11 // pred_check
          %p342 = pneg %p181
        $region34: #{tpu_custom_call.1} parent=11 // pred_check_branch
          %344 = sbr.rel (%p342) target = $region36
        $region35: #{tpu_custom_call.1} parent=11 // pred_region
          _
        $region36: #{tpu_custom_call.1} parent=11 // pred_fallthru
          _
        // Predicated region
        $region37: #{tpu_custom_call.1} parent=11 // pred_check
          %p345 = pneg %p202
        $region38: #{tpu_custom_call.1} parent=11 // pred_check_branch
          %347 = sbr.rel (%p345) target = $region40
        $region39: #{tpu_custom_call.1} parent=11 // pred_region
          _
        $region40: #{tpu_custom_call.1} parent=11 // pred_fallthru
          _
        // Predicated region
        $region41: #{tpu_custom_call.1} parent=11 // pred_check
          %p348 = pneg %p223
        $region42: #{tpu_custom_call.1} parent=11 // pred_check_branch
          %350 = sbr.rel (%p348) target = $region44
        $region43: #{tpu_custom_call.1} parent=11 // pred_region
          _
        $region44: #{tpu_custom_call.1} parent=11 // pred_fallthru
          _
        // Predicated region
        $region45: #{tpu_custom_call.1} parent=11 // pred_check
          %p351 = pneg %p244
        $region46: #{tpu_custom_call.1} parent=11 // pred_check_branch
          %353 = sbr.rel (%p351) target = $region48
        $region47: #{tpu_custom_call.1} parent=11 // pred_region
          _
        $region48: #{tpu_custom_call.1} parent=11 // pred_fallthru
          _
        // Predicated region
        $region49: #{tpu_custom_call.1} parent=11 // pred_check
          %p354 = pneg %p265
        $region50: #{tpu_custom_call.1} parent=11 // pred_check_branch
          %356 = sbr.rel (%p354) target = $region52
        $region51: #{tpu_custom_call.1} parent=11 // pred_region
          _
        $region52: #{tpu_custom_call.1} parent=11 // pred_fallthru
          _
        // Predicated region
        $region53: #{tpu_custom_call.1} parent=11 // pred_check
          %p357 = pneg %p286
        $region54: #{tpu_custom_call.1} parent=11 // pred_check_branch
          %359 = sbr.rel (%p357) target = $region56
        $region55: #{tpu_custom_call.1} parent=11 // pred_region
          _
        $region56: #{tpu_custom_call.1} parent=11 // pred_fallthru
          _
      $region12: #{tpu_custom_call.1} parent=5 // pred_fallthru
        _
      %p360 = scmp.lt.s32.totalorder %s29, 2
      // Predicated region
      $region57: #{tpu_custom_call.1} parent=5 // pred_check
        %p361 = pneg %p360
      $region58: #{tpu_custom_call.1} parent=5 // pred_check_branch
        %363 = sbr.rel (%p361) target = $region60
      $region59: #{tpu_custom_call.1} parent=5 // pred_region
        // Predicated region
        $region61: #{tpu_custom_call.1} parent=59 // pred_check
          %p364 = pneg %p49
        $region62: #{tpu_custom_call.1} parent=59 // pred_check_branch
          %366 = sbr.rel (%p364) target = $region64
        $region63: #{tpu_custom_call.1} parent=59 // pred_region
          %p367 = scmp.lt.s32.totalorder %s29, 1
          %s368 = scalar_select %p367, %s29, 1
          %s369 = smul.addr %s368, 8
          %s370 = scalar_lea.vmem %s1, %s369
        $region64: #{tpu_custom_call.1} parent=59 // pred_fallthru
          _
      $region60: #{tpu_custom_call.1} parent=5 // pred_fallthru
        _
      %p371 = scmp.le.s32.totalorder 1, %s29
      %p372 = scmp.lt.s32.totalorder %s29, 3
      %p373 = pnand %p371, %p372
      %p374 = pneg %p373
      // Predicated region
      $region65: #{tpu_custom_call.1} parent=5 // pred_check
        _
      $region66: #{tpu_custom_call.1} parent=5 // pred_check_branch
        %376 = sbr.rel (%p373) target = $region68
      $region67: #{tpu_custom_call.1} parent=5 // pred_region
        %s377 = ssub.s32 %s29, 1
        %p378 = scmp.lt.s32.totalorder %s34, 1
        %s379 = scalar_select %p378, %s34, 1
        %s380 = smul.addr %s379, 8
        %s381 = scalar_lea.vmem %s1, %s380
        %p382 = pneg %p55
        %p383 = pneg %p52
        %p384 = pneg %p76
        %p385 = pneg %p73
        %p386 = pneg %p97
        %p387 = pneg %p94
        %p388 = pneg %p118
        %p389 = pneg %p115
        %p390 = pneg %p139
        %p391 = pneg %p136
        %p392 = pneg %p160
        %p393 = pneg %p157
        %p394 = pneg %p181
        %p395 = pneg %p178
        %p396 = pneg %p202
        %p397 = pneg %p199
        %p398 = pneg %p223
        %p399 = pneg %p220
        %p400 = pneg %p244
        %p401 = pneg %p241
        %p402 = pneg %p265
        %p403 = pneg %p262
        %p404 = pneg %p286
        %p405 = pneg %p283
        %p406 = pneg %p312
        %p407 = pneg %p309
        %s408 = sand.u32 %s299, 1
        %s409 = scalar_lea.sflag [#allocation7], %s408
        %s410 = sand.u32 %s299, 1
        %s411 = smul.addr %s410, 4
        %s412 = scalar_lea.vmem [#allocation6], %s411
        %p413 = scmp.lt.s32.totalorder %s34, 1
        %s414 = scalar_select %p413, %s34, 1
        %s415 = smul.addr %s414, 8
        %s416 = scalar_lea.vmem %s1, %s415
        %v418 = vld [vmem:[%s416] sm:$0xff]
        %s419 = smul.u32 %s34, 128
        %s420 = sld [smem:[#allocation5 + %s419]]
        %s421 = scalar_lea.vmem %s4, %s420
        %p423 = scmp.lt.u32.totalorder 1, 8
        %p424 = pneg %p423
        // Predicated region
        $region69: #{tpu_custom_call.1} parent=67 // pred_check
          _
        $region70: #{tpu_custom_call.1} parent=67 // pred_check_branch
          %426 = sbr.rel (%p423) target = $region72
        $region71: #{tpu_custom_call.1} parent=67 // pred_region
          %s441 = sand.u32 1, 7
          %p442 = scmp.eq.s32.totalorder %s441, 0
          %p443 = pneg %p442
          // Predicated region
          $region84: #{tpu_custom_call.1} parent=71 // pred_check
            _
          $region85: #{tpu_custom_call.1} parent=71 // pred_check_branch
            %445 = sbr.rel (%p442) target = $region87
          $region86: #{tpu_custom_call.1} parent=71 // pred_region
            %s446 = sand.u32 1, 7
            %s447 = ssub.s32 1, %s446
            %s448 = scalar_lea.vmem %s421, %s447
            %s449 = ssub.s32 1, %s446
            %s450 = scalar_lea.vmem [#allocation2], %s449
            %s451 = sshllo.u32 0, %s446
            loop: start=0, step=1, limit=1
            $region88: #{tpu_custom_call.1} parent=86 // loop_pre_header
              _
            $region89: #{tpu_custom_call.1} parent=86 // loop_header
              %s453 = sphi 0, %s457
              %p454 = scmp.ge.s32.totalorder %s453, 1
              %s458 = sphi %s448, %s448
              %s459 = sphi %s450, %s450
            $region90: #{tpu_custom_call.1} parent=86 // loop_header_branch
              %456 = sbr.rel (%p454) target = $region94
            $region91: #{tpu_custom_call.1} parent=86 // loop_body
              %v460 = vld [vmem:[%s458] sm:%s451]
              %461 = vst [vmem:[%s459] sm:%s451] %v460
            $region92: #{tpu_custom_call.1} parent=86 // loop_footer
              %s457 = sadd.s32 1, %s453
            $region93: #{tpu_custom_call.1} parent=86 // loop_footer_branch
              %452 = sbr.rel target = $region89
            $region94: #{tpu_custom_call.1} parent=86 // loop_exit
              _
          $region87: #{tpu_custom_call.1} parent=71 // pred_fallthru
            _
        $region72: #{tpu_custom_call.1} parent=67 // pred_fallthru
          _
        // Predicated region
        $region73: #{tpu_custom_call.1} parent=67 // pred_check
          %p427 = pneg %p423
        $region74: #{tpu_custom_call.1} parent=67 // pred_check_branch
          %429 = sbr.rel (%p427) target = $region76
        $region75: #{tpu_custom_call.1} parent=67 // pred_region
          %s430 = sshllo.u32 0, 1
          loop: start=0, step=1, limit=1
          $region77: #{tpu_custom_call.1} parent=75 // loop_pre_header
            _
          $region78: #{tpu_custom_call.1} parent=75 // loop_header
            %s432 = sphi 0, %s436
            %p433 = scmp.ge.s32.totalorder %s432, 1
            %s437 = sphi %s421, %s421
            %s438 = sphi [#allocation2], [#allocation2]
          $region79: #{tpu_custom_call.1} parent=75 // loop_header_branch
            %435 = sbr.rel (%p433) target = $region83
          $region80: #{tpu_custom_call.1} parent=75 // loop_body
            %v439 = vld [vmem:[%s437] sm:%s430]
            %440 = vst [vmem:[%s438] sm:%s430] %v439
          $region81: #{tpu_custom_call.1} parent=75 // loop_footer
            %s436 = sadd.s32 1, %s432
          $region82: #{tpu_custom_call.1} parent=75 // loop_footer_branch
            %431 = sbr.rel target = $region78
          $region83: #{tpu_custom_call.1} parent=75 // loop_exit
            _
        $region76: #{tpu_custom_call.1} parent=67 // pred_fallthru
          _
        // Predicated region
        $region95: #{tpu_custom_call.1} parent=67 // pred_check
          _
        $region96: #{tpu_custom_call.1} parent=67 // pred_check_branch
          %464 = sbr.rel (0) target = $region98
        $region97: #{tpu_custom_call.1} parent=67 // pred_region
          %465 = vsyncadd [#allocation3], 16
        $region98: #{tpu_custom_call.1} parent=67 // pred_fallthru
          _
        %s466 = sadd.s32 %s419, 1
        %s467 = sld [smem:[#allocation5 + %s466]]
        %s468 = scalar_lea.vmem %s4, %s467
        %s469 = scalar_lea.vmem [#allocation2], 1
        %s470 = scalar_lea.sflag [#allocation3], 1
        %p472 = scmp.lt.u32.totalorder 1, 8
        %p473 = pneg %p472
        // Predicated region
        $region99: #{tpu_custom_call.1} parent=67 // pred_check
          _
        $region100: #{tpu_custom_call.1} parent=67 // pred_check_branch
          %475 = sbr.rel (%p472) target = $region102
        $region101: #{tpu_custom_call.1} parent=67 // pred_region
          %s490 = sand.u32 1, 7
          %p491 = scmp.eq.s32.totalorder %s490, 0
          %p492 = pneg %p491
          // Predicated region
          $region114: #{tpu_custom_call.1} parent=101 // pred_check
            _
          $region115: #{tpu_custom_call.1} parent=101 // pred_check_branch
            %494 = sbr.rel (%p491) target = $region117
          $region116: #{tpu_custom_call.1} parent=101 // pred_region
            %s495 = sand.u32 1, 7
            %s496 = ssub.s32 1, %s495
            %s497 = scalar_lea.vmem %s468, %s496
            %s498 = ssub.s32 1, %s495
            %s499 = scalar_lea.vmem %s469, %s498 [#allocation2]
            %s500 = sshllo.u32 0, %s495
            loop: start=0, step=1, limit=1
            $region118: #{tpu_custom_call.1} parent=116 // loop_pre_header
              _
            $region119: #{tpu_custom_call.1} parent=116 // loop_header
              %s502 = sphi 0, %s506
              %p503 = scmp.ge.s32.totalorder %s502, 1
              %s507 = sphi %s497, %s497
              %s508 = sphi %s499, %s499
            $region120: #{tpu_custom_call.1} parent=116 // loop_header_branch
              %505 = sbr.rel (%p503) target = $region124
            $region121: #{tpu_custom_call.1} parent=116 // loop_body
              %v509 = vld [vmem:[%s507] sm:%s500]
              %510 = vst [vmem:[%s508] sm:%s500] %v509
            $region122: #{tpu_custom_call.1} parent=116 // loop_footer
              %s506 = sadd.s32 1, %s502
            $region123: #{tpu_custom_call.1} parent=116 // loop_footer_branch
              %501 = sbr.rel target = $region119
            $region124: #{tpu_custom_call.1} parent=116 // loop_exit
              _
          $region117: #{tpu_custom_call.1} parent=101 // pred_fallthru
            _
        $region102: #{tpu_custom_call.1} parent=67 // pred_fallthru
          _
        // Predicated region
        $region103: #{tpu_custom_call.1} parent=67 // pred_check
          %p476 = pneg %p472
        $region104: #{tpu_custom_call.1} parent=67 // pred_check_branch
          %478 = sbr.rel (%p476) target = $region106
        $region105: #{tpu_custom_call.1} parent=67 // pred_region
          %s479 = sshllo.u32 0, 1
          loop: start=0, step=1, limit=1
          $region107: #{tpu_custom_call.1} parent=105 // loop_pre_header
            _
          $region108: #{tpu_custom_call.1} parent=105 // loop_header
            %s481 = sphi 0, %s485
            %p482 = scmp.ge.s32.totalorder %s481, 1
            %s486 = sphi %s468, %s468
            %s487 = sphi %s469, %s469
          $region109: #{tpu_custom_call.1} parent=105 // loop_header_branch
            %484 = sbr.rel (%p482) target = $region113
          $region110: #{tpu_custom_call.1} parent=105 // loop_body
            %v488 = vld [vmem:[%s486] sm:%s479]
            %489 = vst [vmem:[%s487] sm:%s479] %v488
          $region111: #{tpu_custom_call.1} parent=105 // loop_footer
            %s485 = sadd.s32 1, %s481
          $region112: #{tpu_custom_call.1} parent=105 // loop_footer_branch
            %480 = sbr.rel target = $region108
          $region113: #{tpu_custom_call.1} parent=105 // loop_exit
            _
        $region106: #{tpu_custom_call.1} parent=67 // pred_fallthru
          _
        // Predicated region
        $region125: #{tpu_custom_call.1} parent=67 // pred_check
          _
        $region126: #{tpu_custom_call.1} parent=67 // pred_check_branch
          %513 = sbr.rel (0) target = $region128
        $region127: #{tpu_custom_call.1} parent=67 // pred_region
          %514 = vsyncadd %s470, 16
        $region128: #{tpu_custom_call.1} parent=67 // pred_fallthru
          _
        %s515 = sadd.s32 %s419, 2
        %s516 = sld [smem:[#allocation5 + %s515]]
        %s517 = scalar_lea.vmem %s4, %s516
        %s518 = scalar_lea.vmem [#allocation2], 2
        %s519 = scalar_lea.sflag [#allocation3], 2
        %p521 = scmp.lt.u32.totalorder 1, 8
        %p522 = pneg %p521
        // Predicated region
        $region129: #{tpu_custom_call.1} parent=67 // pred_check
          _
        $region130: #{tpu_custom_call.1} parent=67 // pred_check_branch
          %524 = sbr.rel (%p521) target = $region132
        $region131: #{tpu_custom_call.1} parent=67 // pred_region
          %s539 = sand.u32 1, 7
          %p540 = scmp.eq.s32.totalorder %s539, 0
          %p541 = pneg %p540
          // Predicated region
          $region144: #{tpu_custom_call.1} parent=131 // pred_check
            _
          $region145: #{tpu_custom_call.1} parent=131 // pred_check_branch
            %543 = sbr.rel (%p540) target = $region147
          $region146: #{tpu_custom_call.1} parent=131 // pred_region
            %s544 = sand.u32 1, 7
            %s545 = ssub.s32 1, %s544
            %s546 = scalar_lea.vmem %s517, %s545
            %s547 = ssub.s32 1, %s544
            %s548 = scalar_lea.vmem %s518, %s547 [#allocation2]
            %s549 = sshllo.u32 0, %s544
            loop: start=0, step=1, limit=1
            $region148: #{tpu_custom_call.1} parent=146 // loop_pre_header
              _
            $region149: #{tpu_custom_call.1} parent=146 // loop_header
              %s551 = sphi 0, %s555
              %p552 = scmp.ge.s32.totalorder %s551, 1
              %s556 = sphi %s546, %s546
              %s557 = sphi %s548, %s548
            $region150: #{tpu_custom_call.1} parent=146 // loop_header_branch
              %554 = sbr.rel (%p552) target = $region154
            $region151: #{tpu_custom_call.1} parent=146 // loop_body
              %v558 = vld [vmem:[%s556] sm:%s549]
              %559 = vst [vmem:[%s557] sm:%s549] %v558
            $region152: #{tpu_custom_call.1} parent=146 // loop_footer
              %s555 = sadd.s32 1, %s551
            $region153: #{tpu_custom_call.1} parent=146 // loop_footer_branch
              %550 = sbr.rel target = $region149
            $region154: #{tpu_custom_call.1} parent=146 // loop_exit
              _
          $region147: #{tpu_custom_call.1} parent=131 // pred_fallthru
            _
        $region132: #{tpu_custom_call.1} parent=67 // pred_fallthru
          _
        // Predicated region
        $region133: #{tpu_custom_call.1} parent=67 // pred_check
          %p525 = pneg %p521
        $region134: #{tpu_custom_call.1} parent=67 // pred_check_branch
          %527 = sbr.rel (%p525) target = $region136
        $region135: #{tpu_custom_call.1} parent=67 // pred_region
          %s528 = sshllo.u32 0, 1
          loop: start=0, step=1, limit=1
          $region137: #{tpu_custom_call.1} parent=135 // loop_pre_header
            _
          $region138: #{tpu_custom_call.1} parent=135 // loop_header
            %s530 = sphi 0, %s534
            %p531 = scmp.ge.s32.totalorder %s530, 1
            %s535 = sphi %s517, %s517
            %s536 = sphi %s518, %s518
          $region139: #{tpu_custom_call.1} parent=135 // loop_header_branch
            %533 = sbr.rel (%p531) target = $region143
          $region140: #{tpu_custom_call.1} parent=135 // loop_body
            %v537 = vld [vmem:[%s535] sm:%s528]
            %538 = vst [vmem:[%s536] sm:%s528] %v537
          $region141: #{tpu_custom_call.1} parent=135 // loop_footer
            %s534 = sadd.s32 1, %s530
          $region142: #{tpu_custom_call.1} parent=135 // loop_footer_branch
            %529 = sbr.rel target = $region138
          $region143: #{tpu_custom_call.1} parent=135 // loop_exit
            _
        $region136: #{tpu_custom_call.1} parent=67 // pred_fallthru
          _
        // Predicated region
        $region155: #{tpu_custom_call.1} parent=67 // pred_check
          _
        $region156: #{tpu_custom_call.1} parent=67 // pred_check_branch
          %562 = sbr.rel (0) target = $region158
        $region157: #{tpu_custom_call.1} parent=67 // pred_region
          %563 = vsyncadd %s519, 16
        $region158: #{tpu_custom_call.1} parent=67 // pred_fallthru
          _
        %s564 = sadd.s32 %s419, 3
        %s565 = sld [smem:[#allocation5 + %s564]]
        %s566 = scalar_lea.vmem %s4, %s565
        %s567 = scalar_lea.vmem [#allocation2], 3
        %s568 = scalar_lea.sflag [#allocation3], 3
        %p570 = scmp.lt.u32.totalorder 1, 8
        %p571 = pneg %p570
        // Predicated region
        $region159: #{tpu_custom_call.1} parent=67 // pred_check
          _
        $region160: #{tpu_custom_call.1} parent=67 // pred_check_branch
          %573 = sbr.rel (%p570) target = $region162
        $region161: #{tpu_custom_call.1} parent=67 // pred_region
          %s588 = sand.u32 1, 7
          %p589 = scmp.eq.s32.totalorder %s588, 0
          %p590 = pneg %p589
          // Predicated region
          $region174: #{tpu_custom_call.1} parent=161 // pred_check
            _
          $region175: #{tpu_custom_call.1} parent=161 // pred_check_branch
            %592 = sbr.rel (%p589) target = $region177
          $region176: #{tpu_custom_call.1} parent=161 // pred_region
            %s593 = sand.u32 1, 7
            %s594 = ssub.s32 1, %s593
            %s595 = scalar_lea.vmem %s566, %s594
            %s596 = ssub.s32 1, %s593
            %s597 = scalar_lea.vmem %s567, %s596 [#allocation2]
            %s598 = sshllo.u32 0, %s593
            loop: start=0, step=1, limit=1
            $region178: #{tpu_custom_call.1} parent=176 // loop_pre_header
              _
            $region179: #{tpu_custom_call.1} parent=176 // loop_header
              %s600 = sphi 0, %s604
              %p601 = scmp.ge.s32.totalorder %s600, 1
              %s605 = sphi %s595, %s595
              %s606 = sphi %s597, %s597
            $region180: #{tpu_custom_call.1} parent=176 // loop_header_branch
              %603 = sbr.rel (%p601) target = $region184
            $region181: #{tpu_custom_call.1} parent=176 // loop_body
              %v607 = vld [vmem:[%s605] sm:%s598]
              %608 = vst [vmem:[%s606] sm:%s598] %v607
            $region182: #{tpu_custom_call.1} parent=176 // loop_footer
              %s604 = sadd.s32 1, %s600
            $region183: #{tpu_custom_call.1} parent=176 // loop_footer_branch
              %599 = sbr.rel target = $region179
            $region184: #{tpu_custom_call.1} parent=176 // loop_exit
              _
          $region177: #{tpu_custom_call.1} parent=161 // pred_fallthru
            _
        $region162: #{tpu_custom_call.1} parent=67 // pred_fallthru
          _
        // Predicated region
        $region163: #{tpu_custom_call.1} parent=67 // pred_check
          %p574 = pneg %p570
        $region164: #{tpu_custom_call.1} parent=67 // pred_check_branch
          %576 = sbr.rel (%p574) target = $region166
        $region165: #{tpu_custom_call.1} parent=67 // pred_region
          %s577 = sshllo.u32 0, 1
          loop: start=0, step=1, limit=1
          $region167: #{tpu_custom_call.1} parent=165 // loop_pre_header
            _
          $region168: #{tpu_custom_call.1} parent=165 // loop_header
            %s579 = sphi 0, %s583
            %p580 = scmp.ge.s32.totalorder %s579, 1
            %s584 = sphi %s566, %s566
            %s585 = sphi %s567, %s567
          $region169: #{tpu_custom_call.1} parent=165 // loop_header_branch
            %582 = sbr.rel (%p580) target = $region173
          $region170: #{tpu_custom_call.1} parent=165 // loop_body
            %v586 = vld [vmem:[%s584] sm:%s577]
            %587 = vst [vmem:[%s585] sm:%s577] %v586
          $region171: #{tpu_custom_call.1} parent=165 // loop_footer
            %s583 = sadd.s32 1, %s579
          $region172: #{tpu_custom_call.1} parent=165 // loop_footer_branch
            %578 = sbr.rel target = $region168
          $region173: #{tpu_custom_call.1} parent=165 // loop_exit
            _
        $region166: #{tpu_custom_call.1} parent=67 // pred_fallthru
          _
        // Predicated region
        $region185: #{tpu_custom_call.1} parent=67 // pred_check
          _
        $region186: #{tpu_custom_call.1} parent=67 // pred_check_branch
          %611 = sbr.rel (0) target = $region188
        $region187: #{tpu_custom_call.1} parent=67 // pred_region
          %612 = vsyncadd %s568, 16
        $region188: #{tpu_custom_call.1} parent=67 // pred_fallthru
          _
        %s613 = sadd.s32 %s419, 4
        %s614 = sld [smem:[#allocation5 + %s613]]
        %s615 = scalar_lea.vmem %s4, %s614
        %s616 = scalar_lea.vmem [#allocation2], 4
        %s617 = scalar_lea.sflag [#allocation3], 4
        %p619 = scmp.lt.u32.totalorder 1, 8
        %p620 = pneg %p619
        // Predicated region
        $region189: #{tpu_custom_call.1} parent=67 // pred_check
          _
        $region190: #{tpu_custom_call.1} parent=67 // pred_check_branch
          %622 = sbr.rel (%p619) target = $region192
        $region191: #{tpu_custom_call.1} parent=67 // pred_region
          %s637 = sand.u32 1, 7
          %p638 = scmp.eq.s32.totalorder %s637, 0
          %p639 = pneg %p638
          // Predicated region
          $region204: #{tpu_custom_call.1} parent=191 // pred_check
            _
          $region205: #{tpu_custom_call.1} parent=191 // pred_check_branch
            %641 = sbr.rel (%p638) target = $region207
          $region206: #{tpu_custom_call.1} parent=191 // pred_region
            %s642 = sand.u32 1, 7
            %s643 = ssub.s32 1, %s642
            %s644 = scalar_lea.vmem %s615, %s643
            %s645 = ssub.s32 1, %s642
            %s646 = scalar_lea.vmem %s616, %s645 [#allocation2]
            %s647 = sshllo.u32 0, %s642
            loop: start=0, step=1, limit=1
            $region208: #{tpu_custom_call.1} parent=206 // loop_pre_header
              _
            $region209: #{tpu_custom_call.1} parent=206 // loop_header
              %s649 = sphi 0, %s653
              %p650 = scmp.ge.s32.totalorder %s649, 1
              %s654 = sphi %s644, %s644
              %s655 = sphi %s646, %s646
            $region210: #{tpu_custom_call.1} parent=206 // loop_header_branch
              %652 = sbr.rel (%p650) target = $region214
            $region211: #{tpu_custom_call.1} parent=206 // loop_body
              %v656 = vld [vmem:[%s654] sm:%s647]
              %657 = vst [vmem:[%s655] sm:%s647] %v656
            $region212: #{tpu_custom_call.1} parent=206 // loop_footer
              %s653 = sadd.s32 1, %s649
            $region213: #{tpu_custom_call.1} parent=206 // loop_footer_branch
              %648 = sbr.rel target = $region209
            $region214: #{tpu_custom_call.1} parent=206 // loop_exit
              _
          $region207: #{tpu_custom_call.1} parent=191 // pred_fallthru
            _
        $region192: #{tpu_custom_call.1} parent=67 // pred_fallthru
          _
        // Predicated region
        $region193: #{tpu_custom_call.1} parent=67 // pred_check
          %p623 = pneg %p619
        $region194: #{tpu_custom_call.1} parent=67 // pred_check_branch
          %625 = sbr.rel (%p623) target = $region196
        $region195: #{tpu_custom_call.1} parent=67 // pred_region
          %s626 = sshllo.u32 0, 1
          loop: start=0, step=1, limit=1
          $region197: #{tpu_custom_call.1} parent=195 // loop_pre_header
            _
          $region198: #{tpu_custom_call.1} parent=195 // loop_header
            %s628 = sphi 0, %s632
            %p629 = scmp.ge.s32.totalorder %s628, 1
            %s633 = sphi %s615, %s615
            %s634 = sphi %s616, %s616
          $region199: #{tpu_custom_call.1} parent=195 // loop_header_branch
            %631 = sbr.rel (%p629) target = $region203
          $region200: #{tpu_custom_call.1} parent=195 // loop_body
            %v635 = vld [vmem:[%s633] sm:%s626]
            %636 = vst [vmem:[%s634] sm:%s626] %v635
          $region201: #{tpu_custom_call.1} parent=195 // loop_footer
            %s632 = sadd.s32 1, %s628
          $region202: #{tpu_custom_call.1} parent=195 // loop_footer_branch
            %627 = sbr.rel target = $region198
          $region203: #{tpu_custom_call.1} parent=195 // loop_exit
            _
        $region196: #{tpu_custom_call.1} parent=67 // pred_fallthru
          _
        // Predicated region
        $region215: #{tpu_custom_call.1} parent=67 // pred_check
          _
        $region216: #{tpu_custom_call.1} parent=67 // pred_check_branch
          %660 = sbr.rel (0) target = $region218
        $region217: #{tpu_custom_call.1} parent=67 // pred_region
          %661 = vsyncadd %s617, 16
        $region218: #{tpu_custom_call.1} parent=67 // pred_fallthru
          _
        %s662 = sadd.s32 %s419, 5
        %s663 = sld [smem:[#allocation5 + %s662]]
        %s664 = scalar_lea.vmem %s4, %s663
        %s665 = scalar_lea.vmem [#allocation2], 5
        %s666 = scalar_lea.sflag [#allocation3], 5
        %p668 = scmp.lt.u32.totalorder 1, 8
        %p669 = pneg %p668
        // Predicated region
        $region219: #{tpu_custom_call.1} parent=67 // pred_check
          _
        $region220: #{tpu_custom_call.1} parent=67 // pred_check_branch
          %671 = sbr.rel (%p668) target = $region222
        $region221: #{tpu_custom_call.1} parent=67 // pred_region
          %s686 = sand.u32 1, 7
          %p687 = scmp.eq.s32.totalorder %s686, 0
          %p688 = pneg %p687
          // Predicated region
          $region234: #{tpu_custom_call.1} parent=221 // pred_check
            _
          $region235: #{tpu_custom_call.1} parent=221 // pred_check_branch
            %690 = sbr.rel (%p687) target = $region237
          $region236: #{tpu_custom_call.1} parent=221 // pred_region
            %s691 = sand.u32 1, 7
            %s692 = ssub.s32 1, %s691
            %s693 = scalar_lea.vmem %s664, %s692
            %s694 = ssub.s32 1, %s691
            %s695 = scalar_lea.vmem %s665, %s694 [#allocation2]
            %s696 = sshllo.u32 0, %s691
            loop: start=0, step=1, limit=1
            $region238: #{tpu_custom_call.1} parent=236 // loop_pre_header
              _
            $region239: #{tpu_custom_call.1} parent=236 // loop_header
              %s698 = sphi 0, %s702
              %p699 = scmp.ge.s32.totalorder %s698, 1
              %s703 = sphi %s693, %s693
              %s704 = sphi %s695, %s695
            $region240: #{tpu_custom_call.1} parent=236 // loop_header_branch
              %701 = sbr.rel (%p699) target = $region244
            $region241: #{tpu_custom_call.1} parent=236 // loop_body
              %v705 = vld [vmem:[%s703] sm:%s696]
              %706 = vst [vmem:[%s704] sm:%s696] %v705
            $region242: #{tpu_custom_call.1} parent=236 // loop_footer
              %s702 = sadd.s32 1, %s698
            $region243: #{tpu_custom_call.1} parent=236 // loop_footer_branch
              %697 = sbr.rel target = $region239
            $region244: #{tpu_custom_call.1} parent=236 // loop_exit
              _
          $region237: #{tpu_custom_call.1} parent=221 // pred_fallthru
            _
        $region222: #{tpu_custom_call.1} parent=67 // pred_fallthru
          _
        // Predicated region
        $region223: #{tpu_custom_call.1} parent=67 // pred_check
          %p672 = pneg %p668
        $region224: #{tpu_custom_call.1} parent=67 // pred_check_branch
          %674 = sbr.rel (%p672) target = $region226
        $region225: #{tpu_custom_call.1} parent=67 // pred_region
          %s675 = sshllo.u32 0, 1
          loop: start=0, step=1, limit=1
          $region227: #{tpu_custom_call.1} parent=225 // loop_pre_header
            _
          $region228: #{tpu_custom_call.1} parent=225 // loop_header
            %s677 = sphi 0, %s681
            %p678 = scmp.ge.s32.totalorder %s677, 1
            %s682 = sphi %s664, %s664
            %s683 = sphi %s665, %s665
          $region229: #{tpu_custom_call.1} parent=225 // loop_header_branch
            %680 = sbr.rel (%p678) target = $region233
          $region230: #{tpu_custom_call.1} parent=225 // loop_body
            %v684 = vld [vmem:[%s682] sm:%s675]
            %685 = vst [vmem:[%s683] sm:%s675] %v684
          $region231: #{tpu_custom_call.1} parent=225 // loop_footer
            %s681 = sadd.s32 1, %s677
          $region232: #{tpu_custom_call.1} parent=225 // loop_footer_branch
            %676 = sbr.rel target = $region228
          $region233: #{tpu_custom_call.1} parent=225 // loop_exit
            _
        $region226: #{tpu_custom_call.1} parent=67 // pred_fallthru
          _
        // Predicated region
        $region245: #{tpu_custom_call.1} parent=67 // pred_check
          _
        $region246: #{tpu_custom_call.1} parent=67 // pred_check_branch
          %709 = sbr.rel (0) target = $region248
        $region247: #{tpu_custom_call.1} parent=67 // pred_region
          %710 = vsyncadd %s666, 16
        $region248: #{tpu_custom_call.1} parent=67 // pred_fallthru
          _
        %s711 = sadd.s32 %s419, 6
        %s712 = sld [smem:[#allocation5 + %s711]]
        %s713 = scalar_lea.vmem %s4, %s712
        %s714 = scalar_lea.vmem [#allocation2], 6
        %s715 = scalar_lea.sflag [#allocation3], 6
        %p717 = scmp.lt.u32.totalorder 1, 8
        %p718 = pneg %p717
        // Predicated region
        $region249: #{tpu_custom_call.1} parent=67 // pred_check
          _
        $region250: #{tpu_custom_call.1} parent=67 // pred_check_branch
          %720 = sbr.rel (%p717) target = $region252
        $region251: #{tpu_custom_call.1} parent=67 // pred_region
          %s735 = sand.u32 1, 7
          %p736 = scmp.eq.s32.totalorder %s735, 0
          %p737 = pneg %p736
          // Predicated region
          $region264: #{tpu_custom_call.1} parent=251 // pred_check
            _
          $region265: #{tpu_custom_call.1} parent=251 // pred_check_branch
            %739 = sbr.rel (%p736) target = $region267
          $region266: #{tpu_custom_call.1} parent=251 // pred_region
            %s740 = sand.u32 1, 7
            %s741 = ssub.s32 1, %s740
            %s742 = scalar_lea.vmem %s713, %s741
            %s743 = ssub.s32 1, %s740
            %s744 = scalar_lea.vmem %s714, %s743 [#allocation2]
            %s745 = sshllo.u32 0, %s740
            loop: start=0, step=1, limit=1
            $region268: #{tpu_custom_call.1} parent=266 // loop_pre_header
              _
            $region269: #{tpu_custom_call.1} parent=266 // loop_header
              %s747 = sphi 0, %s751
              %p748 = scmp.ge.s32.totalorder %s747, 1
              %s752 = sphi %s742, %s742
              %s753 = sphi %s744, %s744
            $region270: #{tpu_custom_call.1} parent=266 // loop_header_branch
              %750 = sbr.rel (%p748) target = $region274
            $region271: #{tpu_custom_call.1} parent=266 // loop_body
              %v754 = vld [vmem:[%s752] sm:%s745]
              %755 = vst [vmem:[%s753] sm:%s745] %v754
            $region272: #{tpu_custom_call.1} parent=266 // loop_footer
              %s751 = sadd.s32 1, %s747
            $region273: #{tpu_custom_call.1} parent=266 // loop_footer_branch
              %746 = sbr.rel target = $region269
            $region274: #{tpu_custom_call.1} parent=266 // loop_exit
              _
          $region267: #{tpu_custom_call.1} parent=251 // pred_fallthru
            _
        $region252: #{tpu_custom_call.1} parent=67 // pred_fallthru
          _
        // Predicated region
        $region253: #{tpu_custom_call.1} parent=67 // pred_check
          %p721 = pneg %p717
        $region254: #{tpu_custom_call.1} parent=67 // pred_check_branch
          %723 = sbr.rel (%p721) target = $region256
        $region255: #{tpu_custom_call.1} parent=67 // pred_region
          %s724 = sshllo.u32 0, 1
          loop: start=0, step=1, limit=1
          $region257: #{tpu_custom_call.1} parent=255 // loop_pre_header
            _
          $region258: #{tpu_custom_call.1} parent=255 // loop_header
            %s726 = sphi 0, %s730
            %p727 = scmp.ge.s32.totalorder %s726, 1
            %s731 = sphi %s713, %s713
            %s732 = sphi %s714, %s714
          $region259: #{tpu_custom_call.1} parent=255 // loop_header_branch
            %729 = sbr.rel (%p727) target = $region263
          $region260: #{tpu_custom_call.1} parent=255 // loop_body
            %v733 = vld [vmem:[%s731] sm:%s724]
            %734 = vst [vmem:[%s732] sm:%s724] %v733
          $region261: #{tpu_custom_call.1} parent=255 // loop_footer
            %s730 = sadd.s32 1, %s726
          $region262: #{tpu_custom_call.1} parent=255 // loop_footer_branch
            %725 = sbr.rel target = $region258
          $region263: #{tpu_custom_call.1} parent=255 // loop_exit
            _
        $region256: #{tpu_custom_call.1} parent=67 // pred_fallthru
          _
        // Predicated region
        $region275: #{tpu_custom_call.1} parent=67 // pred_check
          _
        $region276: #{tpu_custom_call.1} parent=67 // pred_check_branch
          %758 = sbr.rel (0) target = $region278
        $region277: #{tpu_custom_call.1} parent=67 // pred_region
          %759 = vsyncadd %s715, 16
        $region278: #{tpu_custom_call.1} parent=67 // pred_fallthru
          _
        %s760 = sadd.s32 %s419, 7
        %s761 = sld [smem:[#allocation5 + %s760]]
        %s762 = scalar_lea.vmem %s4, %s761
        %s763 = scalar_lea.vmem [#allocation2], 7
        %s764 = scalar_lea.sflag [#allocation3], 7
        %p766 = scmp.lt.u32.totalorder 1, 8
        %p767 = pneg %p766
        // Predicated region
        $region279: #{tpu_custom_call.1} parent=67 // pred_check
          _
        $region280: #{tpu_custom_call.1} parent=67 // pred_check_branch
          %769 = sbr.rel (%p766) target = $region282
        $region281: #{tpu_custom_call.1} parent=67 // pred_region
          %s784 = sand.u32 1, 7
          %p785 = scmp.eq.s32.totalorder %s784, 0
          %p786 = pneg %p785
          // Predicated region
          $region294: #{tpu_custom_call.1} parent=281 // pred_check
            _
          $region295: #{tpu_custom_call.1} parent=281 // pred_check_branch
            %788 = sbr.rel (%p785) target = $region297
          $region296: #{tpu_custom_call.1} parent=281 // pred_region
            %s789 = sand.u32 1, 7
            %s790 = ssub.s32 1, %s789
            %s791 = scalar_lea.vmem %s762, %s790
            %s792 = ssub.s32 1, %s789
            %s793 = scalar_lea.vmem %s763, %s792 [#allocation2]
            %s794 = sshllo.u32 0, %s789
            loop: start=0, step=1, limit=1
            $region298: #{tpu_custom_call.1} parent=296 // loop_pre_header
              _
            $region299: #{tpu_custom_call.1} parent=296 // loop_header
              %s796 = sphi 0, %s800
              %p797 = scmp.ge.s32.totalorder %s796, 1
              %s801 = sphi %s791, %s791
              %s802 = sphi %s793, %s793
            $region300: #{tpu_custom_call.1} parent=296 // loop_header_branch
              %799 = sbr.rel (%p797) target = $region304
            $region301: #{tpu_custom_call.1} parent=296 // loop_body
              %v803 = vld [vmem:[%s801] sm:%s794]
              %804 = vst [vmem:[%s802] sm:%s794] %v803
            $region302: #{tpu_custom_call.1} parent=296 // loop_footer
              %s800 = sadd.s32 1, %s796
            $region303: #{tpu_custom_call.1} parent=296 // loop_footer_branch
              %795 = sbr.rel target = $region299
            $region304: #{tpu_custom_call.1} parent=296 // loop_exit
              _
          $region297: #{tpu_custom_call.1} parent=281 // pred_fallthru
            _
        $region282: #{tpu_custom_call.1} parent=67 // pred_fallthru
          _
        // Predicated region
        $region283: #{tpu_custom_call.1} parent=67 // pred_check
          %p770 = pneg %p766
        $region284: #{tpu_custom_call.1} parent=67 // pred_check_branch
          %772 = sbr.rel (%p770) target = $region286
        $region285: #{tpu_custom_call.1} parent=67 // pred_region
          %s773 = sshllo.u32 0, 1
          loop: start=0, step=1, limit=1
          $region287: #{tpu_custom_call.1} parent=285 // loop_pre_header
            _
          $region288: #{tpu_custom_call.1} parent=285 // loop_header
            %s775 = sphi 0, %s779
            %p776 = scmp.ge.s32.totalorder %s775, 1
            %s780 = sphi %s762, %s762
            %s781 = sphi %s763, %s763
          $region289: #{tpu_custom_call.1} parent=285 // loop_header_branch
            %778 = sbr.rel (%p776) target = $region293
          $region290: #{tpu_custom_call.1} parent=285 // loop_body
            %v782 = vld [vmem:[%s780] sm:%s773]
            %783 = vst [vmem:[%s781] sm:%s773] %v782
          $region291: #{tpu_custom_call.1} parent=285 // loop_footer
            %s779 = sadd.s32 1, %s775
          $region292: #{tpu_custom_call.1} parent=285 // loop_footer_branch
            %774 = sbr.rel target = $region288
          $region293: #{tpu_custom_call.1} parent=285 // loop_exit
            _
        $region286: #{tpu_custom_call.1} parent=67 // pred_fallthru
          _
        // Predicated region
        $region305: #{tpu_custom_call.1} parent=67 // pred_check
          _
        $region306: #{tpu_custom_call.1} parent=67 // pred_check_branch
          %807 = sbr.rel (0) target = $region308
        $region307: #{tpu_custom_call.1} parent=67 // pred_region
          %808 = vsyncadd %s764, 16
        $region308: #{tpu_custom_call.1} parent=67 // pred_fallthru
          _
        %s809 = scalar_lea.vmem %s2, %s34
        %v810 = vld [vmem:[%s809] sm:$0x1]
        %s811 = scalar_lea.vmem %s3, %s34
        %v812 = vld [vmem:[%s811] sm:$0x1]
        %vm813 = vcmask 261120
        %v814 = vsel %vm813, %v418, 0.0
        %815 = vadd.xlane.f32.xlu0 %v814
        %v816 = vpop.xlane.xlu0 %815
        %v817 = vrcp.pop 32.0
        %v818 = vmul.f32 %v816, %v817
        %v819 = vsub.f32 %v418, %v818
        %v820 = vmul.f32 %v819, %v819
        %v821 = vsel %vm813, %v820, 0.0
        %822 = vadd.xlane.f32.xlu0 %v821
        %v823 = vpop.xlane.xlu0 %822
        %v824 = vmul.f32 %v823, %v817
        %v825 = vadd.f32 %v824, 1e-12
        %v826 = vrsqrt.pop %v825
        %v827 = vmul.f32 %v819, %v826
        %v828 = vlaneseq
        %v829 = vshrl.u32 %v828, 7
        %v830 = vsub.s32 0, %v829
        %v831 = vrot.slane %v810, %v830
        %v832 = vmul.f32 %v827, %v831
        %v833 = vlaneseq
        %v834 = vshrl.u32 %v833, 7
        %v835 = vsub.s32 0, %v834
        %v836 = vrot.slane %v812, %v835
        %v837 = vadd.f32 %v832, %v836
        %s838 = smul.u32 1, 1
        %s839 = sshll.u32 %s838, 4
        %840 = dma.done [#allocation3], %s839
        %s841 = sshll.u32 %s838, 4
        %842 = dma.done %s470, %s841
        %s843 = sshll.u32 %s838, 4
        %844 = dma.done %s519, %s843
        %s845 = sshll.u32 %s838, 4
        %846 = dma.done %s568, %s845
        %s847 = sshll.u32 %s838, 4
        %848 = dma.done %s617, %s847
        %s849 = sshll.u32 %s838, 4
        %850 = dma.done %s666, %s849
        %s851 = sshll.u32 %s838, 4
        %852 = dma.done %s715, %s851
        %s853 = sshll.u32 %s838, 4
        %854 = dma.done %s764, %s853
        %v855 = vld [vmem:[#allocation2] sm:$0xff]
        %v856 = vsel %vm813, %v837, 0.0
        %857 = vadd.xlane.f32.xlu0 %v856
        %v858 = vpop.xlane.xlu0 %857
        %v859 = vsel %vm813, %v855, 0.0
        %860 = vadd.xlane.f32.xlu0 %v859
        %v861 = vpop.xlane.xlu0 %860
        %v862 = vadd.f32 %v858, %v861
        %v863 = vrcp.pop 64.0
        %v864 = vmul.f32 %v862, %v863
        %v865 = vsub.f32 %v837, %v864
        %v866 = vsub.f32 %v855, %v864
        %v867 = vmul.f32 %v865, %v865
        %v868 = vsel %vm813, %v867, 0.0
        %869 = vadd.xlane.f32.xlu0 %v868
        %v870 = vpop.xlane.xlu0 %869
        %v871 = vmul.f32 %v866, %v866
        %v872 = vsel %vm813, %v871, 0.0
        %873 = vadd.xlane.f32.xlu0 %v872
        %v874 = vpop.xlane.xlu0 %873
        %v875 = vadd.f32 %v870, %v874
        %v876 = vmul.f32 %v875, %v863
        %v877 = vadd.f32 %v876, 1e-12
        %v878 = vrsqrt.pop %v877
        %v879 = vmul.f32 %v865, %v878
        %v880 = vld [vmem:[%s5] sm:$0x1]
        %v882 = vlaneseq
        %v883 = vshrl.u32 %v882, 7
        %v884 = vsub.s32 0, %v883
        %v885 = vrot.slane %v880, %v884
        %v887 = vmul.f32 %v879, %v885
        %v888 = vld [vmem:[%s7] sm:$0x1]
        %v890 = vlaneseq
        %v891 = vshrl.u32 %v890, 7
        %v892 = vsub.s32 0, %v891
        %v893 = vrot.slane %v888, %v892
        %v895 = vadd.f32 %v887, %v893
        %v896 = vmul.f32 %v866, %v878
        %v897 = vld [vmem:[%s6] sm:$0x1]
        %v899 = vlaneseq
        %v900 = vshrl.u32 %v899, 7
        %v901 = vsub.s32 0, %v900
        %v902 = vrot.slane %v897, %v901
        %v904 = vmul.f32 %v896, %v902
        %v905 = vld [vmem:[%s8] sm:$0x1]
        %v907 = vlaneseq
        %v908 = vshrl.u32 %v907, 7
        %v909 = vsub.s32 0, %v908
        %v910 = vrot.slane %v905, %v909
        %v912 = vadd.f32 %v904, %v910
        %v913 = vpack.c.bf16 %v895, %v895
        %v914 = vld [vmem:[%s9] sm:$0xf]
        %v915 = vld [vmem:[%s9 + $0x4] sm:$0xf]
        %v916 = vld [vmem:[%s9 + $0x8] sm:$0xf]
        %v917 = vld [vmem:[%s9 + $0xc] sm:$0xf]
        %v918 = vpack.c.bf16 %v912, %v912
        %v919 = vld [vmem:[%s10] sm:$0xf]
        %v920 = vld [vmem:[%s10 + $0x4] sm:$0xf]
        %v921 = vld [vmem:[%s10 + $0x8] sm:$0xf]
        %v922 = vld [vmem:[%s10 + $0xc] sm:$0xf]
        %v927 = vunpack.c.l.b16 %v919
        %v928 = vunpack.c.l.b16 %v920
        %v929 = vunpack.c.l.b16 %v921
        %v930 = vunpack.c.l.b16 %v922
        %v931 = vpack.c.b16 %v928, %v927
        %v932 = vpack.c.b16 %v930, %v929
        %v936 = vsel %vm813, %v918, 0
        %938 = vmatprep.subr.bf16.mxu0 0
        %939 = vmatpush1.bf16.msra.mxu0 %v931
        %940 = vmatprep.subr.bf16.mxu0 0
        %941 = vmatpush1.bf16.msra.mxu0 %v932
        %942 = vmatprep.subr.bf16.mxu0 0
        %943 = vmatpush1.bf16.msra.mxu0 0
        %944 = vmatprep.subr.bf16.mxu0 0
        %945 = vmatpush1.bf16.msra.mxu0 0
        %946 = vmatprep.subr.bf16.mxu0 0
        %947 = vmatpush1.bf16.msra.mxu0 0
        %948 = vmatprep.subr.bf16.mxu0 0
        %949 = vmatpush1.bf16.msra.mxu0 0
        %950 = vmatprep.subr.bf16.mxu0 0
        %951 = vmatpush1.bf16.msra.mxu0 0
        %952 = vmatprep.subr.bf16.mxu0 0
        %953 = vmatpush1.bf16.msra.mxu0 0
        %954 = vmatprep.subr.bf16.mxu0 0
        %955 = vmatpush1.bf16.msra.mxu0 0
        %956 = vmatprep.subr.bf16.mxu0 0
        %957 = vmatpush1.bf16.msra.mxu0 0
        %958 = vmatprep.subr.bf16.mxu0 0
        %959 = vmatpush1.bf16.msra.mxu0 0
        %960 = vmatprep.subr.bf16.mxu0 0
        %961 = vmatpush1.bf16.msra.mxu0 0
        %962 = vmatprep.subr.bf16.mxu0 0
        %963 = vmatpush1.bf16.msra.mxu0 0
        %964 = vmatprep.subr.bf16.mxu0 0
        %965 = vmatpush1.bf16.msra.mxu0 0
        %966 = vmatprep.subr.bf16.mxu0 0
        %967 = vmatpush1.bf16.msra.mxu0 0
        %968 = vmatprep.subr.bf16.mxu0 0
        %969 = vmatpush1.bf16.msra.mxu0 0
        %970 = vmatprep.mubr.bf16.mxu0 0
        %971 = vmatmul.mubr.bf16.gmra.mrb[0].mxu0 %v936
        %v972 = vpop.f32.mrb[0].mxu0
        %v973 = vadd.f32 0.0, %v972
        %v974 = vpop.f32.mrb[0].mxu0
        %v975 = vpop.f32.mrb[0].mxu0
        %v976 = vpop.f32.mrb[0].mxu0
        %977 = vdwg.mxu0
        %v982 = vunpack.c.l.b16 %v914
        %v983 = vunpack.c.l.b16 %v915
        %v984 = vunpack.c.l.b16 %v916
        %v985 = vunpack.c.l.b16 %v917
        %v986 = vpack.c.b16 %v983, %v982
        %v987 = vpack.c.b16 %v985, %v984
        %v991 = vsel %vm813, %v913, 0
        %993 = vmatprep.subr.bf16.mxu0 0
        %994 = vmatpush1.bf16.msra.mxu0 %v986
        %995 = vmatprep.subr.bf16.mxu0 0
        %996 = vmatpush1.bf16.msra.mxu0 %v987
        %997 = vmatprep.subr.bf16.mxu0 0
        %998 = vmatpush1.bf16.msra.mxu0 0
        %999 = vmatprep.subr.bf16.mxu0 0
        %1000 = vmatpush1.bf16.msra.mxu0 0
        %1001 = vmatprep.subr.bf16.mxu0 0
        %1002 = vmatpush1.bf16.msra.mxu0 0
        %1003 = vmatprep.subr.bf16.mxu0 0
        %1004 = vmatpush1.bf16.msra.mxu0 0
        %1005 = vmatprep.subr.bf16.mxu0 0
        %1006 = vmatpush1.bf16.msra.mxu0 0
        %1007 = vmatprep.subr.bf16.mxu0 0
        %1008 = vmatpush1.bf16.msra.mxu0 0
        %1009 = vmatprep.subr.bf16.mxu0 0
        %1010 = vmatpush1.bf16.msra.mxu0 0
        %1011 = vmatprep.subr.bf16.mxu0 0
        %1012 = vmatpush1.bf16.msra.mxu0 0
        %1013 = vmatprep.subr.bf16.mxu0 0
        %1014 = vmatpush1.bf16.msra.mxu0 0
        %1015 = vmatprep.subr.bf16.mxu0 0
        %1016 = vmatpush1.bf16.msra.mxu0 0
        %1017 = vmatprep.subr.bf16.mxu0 0
        %1018 = vmatpush1.bf16.msra.mxu0 0
        %1019 = vmatprep.subr.bf16.mxu0 0
        %1020 = vmatpush1.bf16.msra.mxu0 0
        %1021 = vmatprep.subr.bf16.mxu0 0
        %1022 = vmatpush1.bf16.msra.mxu0 0
        %1023 = vmatprep.subr.bf16.mxu0 0
        %1024 = vmatpush1.bf16.msra.mxu0 0
        %1025 = vmatprep.mubr.bf16.mxu0 0
        %1026 = vmatmul.mubr.bf16.gmra.mrb[0].mxu0 %v991
        %v1027 = vpop.f32.mrb[0].mxu0
        %v1028 = vadd.f32 %v973, %v1027
        %v1029 = vpop.f32.mrb[0].mxu0
        %v1030 = vpop.f32.mrb[0].mxu0
        %v1031 = vpop.f32.mrb[0].mxu0
        %1032 = vdwg.mxu0
        %v1033 = vld [vmem:[%s11] sm:$0x1]
        %v1035 = vlaneseq
        %v1036 = vshrl.u32 %v1035, 7
        %v1037 = vsub.s32 0, %v1036
        %v1038 = vrot.slane %v1033, %v1037
        %v1040 = vadd.f32 %v1028, %v1038
        %v1041 = vmax.f32 %v1040, 0.0
        %v1042 = vpack.c.bf16 %v1041, %v1041
        %v1043 = vld [vmem:[%s12] sm:$0xf]
        %v1044 = vld [vmem:[%s12 + $0x4] sm:$0xf]
        %v1045 = vld [vmem:[%s12 + $0x8] sm:$0xf]
        %v1046 = vld [vmem:[%s12 + $0xc] sm:$0xf]
        %v1047 = vld [vmem:[%s12 + $0x10] sm:$0xf]
        %v1048 = vld [vmem:[%s12 + $0x14] sm:$0xf]
        %v1049 = vld [vmem:[%s12 + $0x18] sm:$0xf]
        %v1050 = vld [vmem:[%s12 + $0x1c] sm:$0xf]
        %v1051 = vld [vmem:[%s12 + $0x20] sm:$0xf]
        %v1052 = vld [vmem:[%s12 + $0x24] sm:$0xf]
        %v1053 = vld [vmem:[%s12 + $0x28] sm:$0xf]
        %v1054 = vld [vmem:[%s12 + $0x2c] sm:$0xf]
        %v1055 = vld [vmem:[%s12 + $0x30] sm:$0xf]
        %v1056 = vld [vmem:[%s12 + $0x34] sm:$0xf]
        %v1057 = vld [vmem:[%s12 + $0x38] sm:$0xf]
        %v1058 = vld [vmem:[%s12 + $0x3c] sm:$0xf]
        %v1059 = vld [vmem:[%s13] sm:$0x1]
        %v1061 = vlaneseq
        %v1062 = vshrl.u32 %v1061, 7
        %v1063 = vsub.s32 0, %v1062
        %v1064 = vrot.slane %v1059, %v1063
        %v1082 = vunpack.c.l.b16 %v1043
        %v1083 = vunpack.c.l.b16 %v1044
        %v1084 = vunpack.c.l.b16 %v1045
        %v1085 = vunpack.c.l.b16 %v1046
        %v1086 = vunpack.c.l.b16 %v1047
        %v1087 = vunpack.c.l.b16 %v1048
        %v1088 = vunpack.c.l.b16 %v1049
        %v1089 = vunpack.c.l.b16 %v1050
        %v1090 = vunpack.c.l.b16 %v1051
        %v1091 = vunpack.c.l.b16 %v1052
        %v1092 = vunpack.c.l.b16 %v1053
        %v1093 = vunpack.c.l.b16 %v1054
        %v1094 = vunpack.c.l.b16 %v1055
        %v1095 = vunpack.c.l.b16 %v1056
        %v1096 = vunpack.c.l.b16 %v1057
        %v1097 = vunpack.c.l.b16 %v1058
        %v1098 = vpack.c.b16 %v1083, %v1082
        %v1099 = vpack.c.b16 %v1085, %v1084
        %v1100 = vpack.c.b16 %v1087, %v1086
        %v1101 = vpack.c.b16 %v1089, %v1088
        %v1102 = vpack.c.b16 %v1091, %v1090
        %v1103 = vpack.c.b16 %v1093, %v1092
        %v1104 = vpack.c.b16 %v1095, %v1094
        %v1105 = vpack.c.b16 %v1097, %v1096
        %1114 = vmatprep.subr.bf16.mxu0 0
        %1115 = vmatpush1.bf16.msra.mxu0 %v1098
        %1116 = vmatprep.subr.bf16.mxu0 0
        %1117 = vmatpush1.bf16.msra.mxu0 %v1099
        %1118 = vmatprep.subr.bf16.mxu0 0
        %1119 = vmatpush1.bf16.msra.mxu0 %v1100
        %1120 = vmatprep.subr.bf16.mxu0 0
        %1121 = vmatpush1.bf16.msra.mxu0 %v1101
        %1122 = vmatprep.subr.bf16.mxu0 0
        %1123 = vmatpush1.bf16.msra.mxu0 %v1102
        %1124 = vmatprep.subr.bf16.mxu0 0
        %1125 = vmatpush1.bf16.msra.mxu0 %v1103
        %1126 = vmatprep.subr.bf16.mxu0 0
        %1127 = vmatpush1.bf16.msra.mxu0 %v1104
        %1128 = vmatprep.subr.bf16.mxu0 0
        %1129 = vmatpush1.bf16.msra.mxu0 %v1105
        %1130 = vmatprep.subr.bf16.mxu0 0
        %1131 = vmatpush1.bf16.msra.mxu0 0
        %1132 = vmatprep.subr.bf16.mxu0 0
        %1133 = vmatpush1.bf16.msra.mxu0 0
        %1134 = vmatprep.subr.bf16.mxu0 0
        %1135 = vmatpush1.bf16.msra.mxu0 0
        %1136 = vmatprep.subr.bf16.mxu0 0
        %1137 = vmatpush1.bf16.msra.mxu0 0
        %1138 = vmatprep.subr.bf16.mxu0 0
        %1139 = vmatpush1.bf16.msra.mxu0 0
        %1140 = vmatprep.subr.bf16.mxu0 0
        %1141 = vmatpush1.bf16.msra.mxu0 0
        %1142 = vmatprep.subr.bf16.mxu0 0
        %1143 = vmatpush1.bf16.msra.mxu0 0
        %1144 = vmatprep.subr.bf16.mxu0 0
        %1145 = vmatpush1.bf16.msra.mxu0 0
        %1146 = vmatprep.mubr.bf16.mxu0 0
        %1147 = vmatmul.mubr.bf16.gmra.mrb[0].mxu0 %v1042
        %v1148 = vpop.f32.mrb[0].mxu0
        %v1149 = vadd.f32 %v1064, %v1148
        %v1150 = vpop.f32.mrb[0].mxu0
        %v1151 = vpop.f32.mrb[0].mxu0
        %v1152 = vpop.f32.mrb[0].mxu0
        %1153 = vdwg.mxu0
        %v1154 = vxor.u32 %v1149, 2147483648
        %v1155 = vmul.f32 %v1154, 1.442695
        %v1156 = vpow.pop %v1155
        %v1157 = vadd.f32 %v1156, 1.0
        %v1158 = vrcp.pop %v1157
        %v1159 = vmul.f32 1.0, %v1158
        %v1160 = vpack.c.bf16 %v1159, %v1159
        %1161 = vst [vmem:[%s412] sm:$0xf] %v1160
        %s1162 = sand.u32 %s299, 1
        %s1163 = scalar_lea.sflag [#allocation7], %s1162
        %s1164 = sand.u32 %s299, 1
        %s1165 = smul.addr %s1164, 4
        %s1166 = scalar_lea.vmem [#allocation6], %s1165
        // Predicated region
        $region309: #{tpu_custom_call.1} parent=67 // pred_check
          %p1167 = pneg %p309
        $region310: #{tpu_custom_call.1} parent=67 // pred_check_branch
          %1169 = sbr.rel (%p1167) target = $region312
        $region311: #{tpu_custom_call.1} parent=67 // pred_region
          %s1171 = ssub.s32 64, 64
          %1172 = vsyncadd %s1163, %s1171
          %s1173 = smul.addr %s34, 64
          %s1174 = scalar_lea.hbm %s14, %s1173
          %s1176 = sshll.u32 %s1166, 4
          %s1177 = int_to_ptr.vmem [resolvable:$true] %s1176
          %1179 = dma.vmem_to_hbm [thread:$0]  %s1177, 64, %s1174, %s1163
        $region312: #{tpu_custom_call.1} parent=67 // pred_fallthru
          _
      $region68: #{tpu_custom_call.1} parent=5 // pred_fallthru
        _
      %p1180 = scmp.le.s32.totalorder 2, %s29
      // Predicated region
      $region313: #{tpu_custom_call.1} parent=5 // pred_check
        %p1181 = pneg %p1180
      $region314: #{tpu_custom_call.1} parent=5 // pred_check_branch
        %1183 = sbr.rel (%p1181) target = $region316
      $region315: #{tpu_custom_call.1} parent=5 // pred_region
        %s1184 = ssub.s32 %s29, 2
        // Predicated region
        $region317: #{tpu_custom_call.1} parent=315 // pred_check
          %p1185 = pneg %p315
        $region318: #{tpu_custom_call.1} parent=315 // pred_check_branch
          %1187 = sbr.rel (%p1185) target = $region320
        $region319: #{tpu_custom_call.1} parent=315 // pred_region
          %s1188 = sand.u32 %s300, 1
          %s1189 = scalar_lea.sflag [#allocation7], %s1188
          %s1190 = sand.u32 %s300, 1
          %s1191 = smul.addr %s1190, 4
          %s1192 = scalar_lea.vmem [#allocation6], %s1191
          %1193 = dma.done %s1189, 64
        $region320: #{tpu_custom_call.1} parent=315 // pred_fallthru
          _
      $region316: #{tpu_custom_call.1} parent=5 // pred_fallthru
        _
    $region6: #{tpu_custom_call.1} parent=1 // loop_footer
      %s33 = sadd.s32 1, %s29
    $region7: #{tpu_custom_call.1} parent=1 // loop_footer_branch
      %28 = sbr.rel target = $region3
    $region8: #{tpu_custom_call.1} parent=1 // loop_exit
      _
    %1194 = vsyncpa [#allocation7], 1
    %s1195 = scalar_lea.sflag [#allocation7], 1
    %1196 = vsyncpa %s1195, 1
  %1197 = vsyncmov [#allocation3]
  %s1198 = vpop.sfrf %1197
  %p1199 = scmp.eq.s32.totalorder %s1198, 0
  %p1200 = pneg %p1199
  %1202 = shalt.err (%p1200)
  %s1203 = scalar_lea.sflag [#allocation3], 1
  %1204 = vsyncmov %s1203
  %s1205 = vpop.sfrf %1204
  %p1206 = scmp.eq.s32.totalorder %s1205, 0
  %p1207 = pneg %p1206
  %1209 = shalt.err (%p1207)
  %s1210 = scalar_lea.sflag [#allocation3], 2
  %1211 = vsyncmov %s1210
  %s1212 = vpop.sfrf %1211
  %p1213 = scmp.eq.s32.totalorder %s1212, 0
  %p1214 = pneg %p1213
  %1216 = shalt.err (%p1214)
  %s1217 = scalar_lea.sflag [#allocation3], 3
  %1218 = vsyncmov %s1217
  %s1219 = vpop.sfrf %1218
  %p1220 = scmp.eq.s32.totalorder %s1219, 0
  %p1221 = pneg %p1220
  %1223 = shalt.err (%p1221)
  %s1224 = scalar_lea.sflag [#allocation3], 4
  %1225 = vsyncmov %s1224
  %s1226 = vpop.sfrf %1225
  %p1227 = scmp.eq.s32.totalorder %s1226, 0
  %p1228 = pneg %p1227
  %1230 = shalt.err (%p1228)
  %s1231 = scalar_lea.sflag [#allocation3], 5
  %1232 = vsyncmov %s1231
  %s1233 = vpop.sfrf %1232
  %p1234 = scmp.eq.s32.totalorder %s1233, 0
  %p1235 = pneg %p1234
  %1237 = shalt.err (%p1235)
  %s1238 = scalar_lea.sflag [#allocation3], 6
  %1239 = vsyncmov %s1238
  %s1240 = vpop.sfrf %1239
  %p1241 = scmp.eq.s32.totalorder %s1240, 0
  %p1242 = pneg %p1241
  %1244 = shalt.err (%p1242)
  %s1245 = scalar_lea.sflag [#allocation3], 7
  %1246 = vsyncmov %s1245
  %s1247 = vpop.sfrf %1246
  %p1248 = scmp.eq.s32.totalorder %s1247, 0
  %p1249 = pneg %p1248
  %1251 = shalt.err (%p1249)

</llo_original>
